<compile_context>
chip_gen: v5e
topology: v5e:2x2
jax: 0.10.0
libtpu: 0.0.40
codegen_flags: <defaults>
</compile_context>

<pallas_src>
import functools

import jax
import jax.numpy as jnp
from jax.experimental import pallas as pl
from jax.experimental.pallas import tpu as pltpu


# --------------------------------------------------------------------------
# Kernel: one grid step = graphs_per_block graphs
# --------------------------------------------------------------------------
def mnist_gnn_kernel(a_ref, x_ref,
                     w1_ref, b1_ref, w2_ref, b2_ref, w3_ref, b3_ref,
                     wc1m_ref, wc1x_ref, bc1_ref, wc2_ref, bc2_ref,
                     out_ref):
    a = a_ref[...]                                  # (gpb, npg, npg) compute dtype
    gpb, npg, _ = a.shape
    hp = w1_ref.shape[1]

    # ---- layer 1: x @ W1 on the MXU (K zero-padded 3 -> 8) ----
    x = x_ref[...].astype(w1_ref.dtype)             # (gpb*npg, din_pad)
    hw = jnp.dot(x, w1_ref[...], preferred_element_type=jnp.float32)

    def propagate(hw_flat, b_ref, do_relu):
        # Block-diagonal A_hat: batched per-graph (npg,npg) @ (npg,Hp) matmul.
        h3 = hw_flat.reshape(gpb, npg, hp).astype(a.dtype)
        hv = jnp.einsum('gij,gjh->gih', a, h3,
                        preferred_element_type=jnp.float32)
        hv = hv.reshape(gpb * npg, hp) + b_ref[...]  # bias/relu in f32 (v5e-safe)
        if do_relu:
            hv = jnp.maximum(hv, 0.0)
        return hv

    h = propagate(hw, b1_ref, True)

    # ---- layers 2, 3: A_hat @ (h @ W) + b  (BN folded into W, b) ----
    for w_ref, b_ref, relu in ((w2_ref, b2_ref, True), (w3_ref, b3_ref, False)):
        hw = jnp.dot(h.astype(w_ref.dtype), w_ref[...],
                     preferred_element_type=jnp.float32)
        h = propagate(hw, b_ref, relu)

    # ---- global mean / max pool (npg multiple of 8 -> layout-free reshape) ----
    h3 = h.reshape(gpb, npg, hp)
    mean_pool = jnp.sum(h3, axis=1) * (1.0 / npg)    # (gpb, Hp)
    max_pool = jnp.max(h3, axis=1)                   # (gpb, Hp)
    # NOTE: max over zero-padded hidden lanes (64..127) yields 0; harmless
    # only because the matching wc1x rows are zero-padded.

    # ---- classifier: split wc1 avoids a lane-axis concat ----
    c = (jnp.dot(mean_pool.astype(wc1m_ref.dtype), wc1m_ref[...],
                 preferred_element_type=jnp.float32)
         + jnp.dot(max_pool.astype(wc1x_ref.dtype), wc1x_ref[...],
                   preferred_element_type=jnp.float32)
         + bc1_ref[...])
    c = jnp.maximum(c, 0.0)
    logits = jnp.dot(c.astype(wc2_ref.dtype), wc2_ref[...],
                     preferred_element_type=jnp.float32) + bc2_ref[...]
    # padded class lanes carry bias -1e30 -> exp() == 0, log_softmax unaffected

    # ---- log_softmax over (padded) class lanes ----
    m = jnp.max(logits, axis=1, keepdims=True)
    shifted = logits - m
    lse = jnp.log(jnp.sum(jnp.exp(shifted), axis=1, keepdims=True))
    out_ref[...] = shifted - lse


# --------------------------------------------------------------------------
# Wrapper
# --------------------------------------------------------------------------
@functools.partial(jax.jit, static_argnums=(3, 4))
def mnist_gnn_forward(a_blocks, x_pad, prepared, graphs_per_block, num_classes):
    g_total, npg, _ = a_blocks.shape
    assert g_total % graphs_per_block == 0
    assert npg % 8 == 0, "nodes_per_graph must be a multiple of 8"
    num_blocks = g_total // graphs_per_block
    rows = graphs_per_block * npg
    din_pad = x_pad.shape[1]
    hp = prepared["w2"].shape[1]
    cp = prepared["wc2"].shape[1]

    const2 = lambda i: (0, 0)          # weights/biases: resident across grid steps
    weight_specs = [
        pl.BlockSpec((din_pad, hp), const2),   # w1
        pl.BlockSpec((1, hp), const2),         # b1
        pl.BlockSpec((hp, hp), const2),        # w2
        pl.BlockSpec((1, hp), const2),         # b2
        pl.BlockSpec((hp, hp), const2),        # w3
        pl.BlockSpec((1, hp), const2),         # b3
        pl.BlockSpec((hp, hp), const2),        # wc1m
        pl.BlockSpec((hp, hp), const2),        # wc1x
        pl.BlockSpec((1, hp), const2),         # bc1
        pl.BlockSpec((hp, cp), const2),        # wc2
        pl.BlockSpec((1, cp), const2),         # bc2
    ]
    in_specs = [
        pl.BlockSpec((graphs_per_block, npg, npg), lambda i: (i, 0, 0)),  # A blocks
        pl.BlockSpec((rows, din_pad), lambda i: (i, 0)),                  # node feats
    ] + weight_specs
    out_spec = pl.BlockSpec((graphs_per_block, cp), lambda i: (i, 0))

    n = g_total * npg
    flops = (2 * n * din_pad * hp              # x @ W1
             + 2 * n * npg * hp * 3            # block-diagonal A_hat propagation x3
             + 2 * n * hp * hp * 2             # h @ W2, h @ W3
             + 2 * g_total * hp * hp * 2       # classifier mean/max matmuls
             + 2 * g_total * hp * cp)          # classifier output matmul
    bytes_accessed = (a_blocks.size * a_blocks.dtype.itemsize
                      + x_pad.size * x_pad.dtype.itemsize
                      + sum(v.size * v.dtype.itemsize for v in prepared.values())
                      + g_total * cp * 4)

    out_padded = pl.pallas_call(
        mnist_gnn_kernel,
        grid=(num_blocks,),
        in_specs=in_specs,
        out_specs=out_spec,
        out_shape=jax.ShapeDtypeStruct((g_total, cp), jnp.float32),
        compiler_params=pltpu.CompilerParams(
            dimension_semantics=("parallel",)),   # v7x: shard graph axis over 2 TCs
        cost_estimate=pl.CostEstimate(flops=flops,
                                      transcendentals=g_total * (cp + 1),
                                      bytes_accessed=bytes_accessed),
    )(a_blocks, x_pad,
      prepared["w1"], prepared["b1"],
      prepared["w2"], prepared["b2"],
      prepared["w3"], prepared["b3"],
      prepared["wc1m"], prepared["wc1x"], prepared["bc1"],
      prepared["wc2"], prepared["bc2"])
    return out_padded[:, :num_classes]


# --------------------------------------------------------------------------
# Parameter prep: BN folding + lane-dense padding + optional bf16 cast
# --------------------------------------------------------------------------
def fold_and_pad_params(params, hidden_dim, num_classes,
                        din_pad=8, hidden_pad=128, class_pad=128,
                        compute_dtype=jnp.float32):
    def fold(w, b, s, t):
        return w * s, b * s + t                      # W' = W*s, b' = b*s + t

    w1, b1 = fold(params["w1"], params["b1"], params["s1"], params["t1"])
    w2, b2 = fold(params["w2"], params["b2"], params["s2"], params["t2"])
    w3, b3 = fold(params["w3"], params["b3"], params["s3"], params["t3"])

    hp, cp = hidden_pad, class_pad

    def pad(m, rows, cols):
        return jnp.pad(m, ((0, rows - m.shape[0]), (0, cols - m.shape[1])))

    out = {}
    out["w1"] = pad(w1, din_pad, hp).astype(compute_dtype)   # K padded 3 -> 8 (MXU)
    out["b1"] = pad(b1, 1, hp)
    out["w2"] = pad(w2, hp, hp).astype(compute_dtype)
    out["b2"] = pad(b2, 1, hp)
    out["w3"] = pad(w3, hp, hp).astype(compute_dtype)
    out["b3"] = pad(b3, 1, hp)

    wc1 = params["wc1"]                              # (2H, H)
    out["wc1m"] = pad(wc1[:hidden_dim, :], hp, hp).astype(compute_dtype)
    out["wc1x"] = pad(wc1[hidden_dim:, :], hp, hp).astype(compute_dtype)
    out["bc1"] = pad(params["bc1"], 1, hp)
    out["wc2"] = pad(params["wc2"], hp, cp).astype(compute_dtype)
    bc2 = jnp.full((1, cp), -1e30, jnp.float32)      # mask padded class lanes
    bc2 = bc2.at[:, :num_classes].set(params["bc2"][0])
    out["bc2"] = bc2
    return out


# --------------------------------------------------------------------------
# Plain-JAX references
# --------------------------------------------------------------------------
def _dot32(a, b):
    return jnp.dot(a, b, preferred_element_type=jnp.float32,
                   precision=jax.lax.Precision.HIGHEST)


def reference_forward_original(a_dense, x, params, pool_mean, pool_mask):
    """Original module semantics (dense A, unfolded BN, concat, masked max)."""
    h = x
    for w, b, s, t, relu in [("w1", "b1", "s1", "t1", True),
                             ("w2", "b2", "s2", "t2", True),
                             ("w3", "b3", "s3", "t3", False)]:
        h = _dot32(a_dense, _dot32(h, params[w])) + params[b]
        h = h * params[s] + params[t]
        if relu:
            h = jnp.maximum(h, 0.0)
    mean_pool = _dot32(pool_mean, h)
    masked = jnp.where(pool_mask[:, :, None] > 0, h[None, :, :], -jnp.inf)
    max_pool = jnp.max(masked, axis=1)
    z = jnp.concatenate([mean_pool, max_pool], axis=1)
    c = jnp.maximum(_dot32(z, params["wc1"]) + params["bc1"], 0.0)
    logits = _dot32(c, params["wc2"]) + params["bc2"]
    return jax.nn.log_softmax(logits, axis=1)


def reference_forward_prepared(a_blocks, x_pad, prep, num_classes, compute_dtype):
    """Mirrors the kernel math exactly (folded/padded params, block A, same casts)."""
    a = a_blocks.astype(compute_dtype)
    g, npg, _ = a.shape
    hp = prep["w2"].shape[1]
    hw = jnp.dot(x_pad.astype(prep["w1"].dtype), prep["w1"],
                 preferred_element_type=jnp.float32)

    def prop(hw_flat, b, relu):
        h3 = hw_flat.reshape(g, npg, hp).astype(compute_dtype)
        hv = jnp.einsum('gij,gjh->gih', a, h3,
                        preferred_element_type=jnp.float32)
        hv = hv.reshape(g * npg, hp) + b
        return jnp.maximum(hv, 0.0) if relu else hv

    h = prop(hw, prep["b1"], True)
    for wk, bk, relu in (("w2", "b2", True), ("w3", "b3", False)):
        hw = jnp.dot(h.astype(prep[wk].dtype), prep[wk],
                     preferred_element_type=jnp.float32)
        h = prop(hw, prep[bk], relu)
    h3 = h.reshape(g, npg, hp)
    mean_pool = jnp.sum(h3, axis=1) * (1.0 / npg)
    max_pool = jnp.max(h3, axis=1)
    c = (jnp.dot(mean_pool.astype(compute_dtype), prep["wc1m"],
                 preferred_element_type=jnp.float32)
         + jnp.dot(max_pool.astype(compute_dtype), prep["wc1x"],
                   preferred_element_type=jnp.float32)
         + prep["bc1"])
    c = jnp.maximum(c, 0.0)
    logits = jnp.dot(c.astype(compute_dtype), prep["wc2"],
                     preferred_element_type=jnp.float32) + prep["bc2"]
    return jax.nn.log_softmax(logits, axis=1)[:, :num_classes]


# --------------------------------------------------------------------------
# Test data
# --------------------------------------------------------------------------
def fold_bn(gamma, beta, mean, var, eps=1e-5):
    s = gamma / jnp.sqrt(var + eps)
    t = beta - mean * s
    return s[None, :], t[None, :]


def make_params(key, input_dim, hidden_dim, num_classes):
    ks = jax.random.split(key, 16)
    p = {}
    p["w1"] = jax.random.normal(ks[0], (input_dim, hidden_dim), jnp.float32) * 0.2
    p["b1"] = jax.random.normal(ks[1], (1, hidden_dim), jnp.float32) * 0.05
    p["s1"], p["t1"] = fold_bn(
        1.0 + 0.1 * jax.random.normal(ks[2], (hidden_dim,), jnp.float32),
        0.05 * jax.random.normal(ks[3], (hidden_dim,), jnp.float32),
        0.1 * jax.random.normal(ks[4], (hidden_dim,), jnp.float32),
        1.0 + 0.1 * jnp.abs(jax.random.normal(ks[5], (hidden_dim,), jnp.float32)))
    p["w2"] = jax.random.normal(ks[6], (hidden_dim, hidden_dim), jnp.float32) * 0.2
    p["b2"] = jax.random.normal(ks[7], (1, hidden_dim), jnp.float32) * 0.05
    p["s2"], p["t2"] = fold_bn(
        1.0 + 0.1 * jax.random.normal(ks[8], (hidden_dim,), jnp.float32),
        0.05 * jax.random.normal(ks[9], (hidden_dim,), jnp.float32),
        0.1 * jax.random.normal(ks[10], (hidden_dim,), jnp.float32),
        1.0 + 0.1 * jnp.abs(jax.random.normal(ks[11], (hidden_dim,), jnp.float32)))
    p["w3"] = jax.random.normal(ks[12], (hidden_dim, hidden_dim), jnp.float32) * 0.2
    p["b3"] = jax.random.normal(ks[13], (1, hidden_dim), jnp.float32) * 0.05
    p["s3"], p["t3"] = fold_bn(
        1.0 + 0.1 * jax.random.normal(ks[14], (hidden_dim,), jnp.float32),
        0.05 * jax.random.normal(ks[15], (hidden_dim,), jnp.float32),
        jnp.zeros((hidden_dim,), jnp.float32),
        jnp.ones((hidden_dim,), jnp.float32))
    kc = jax.random.split(jax.random.fold_in(key, 123), 4)
    p["wc1"] = jax.random.normal(kc[0], (hidden_dim * 2, hidden_dim), jnp.float32) * 0.2
    p["bc1"] = jax.random.normal(kc[1], (1, hidden_dim), jnp.float32) * 0.05
    p["wc2"] = jax.random.normal(kc[2], (hidden_dim, num_classes), jnp.float32) * 0.2
    p["bc2"] = jax.random.normal(kc[3], (1, num_classes), jnp.float32) * 0.05
    return p


def build_graph_blocks(num_graphs, nodes_per_graph):
    """Deterministic batched graph: per-graph chain + one extra (varying) edge."""
    blocks = []
    for g in range(num_graphs):
        src, dst = [], []
        for i in range(nodes_per_graph - 1):
            src += [i, i + 1]
            dst += [i + 1, i]
        extra = 2 + (g % (nodes_per_graph - 3))
        src += [0, extra]
        dst += [extra, 0]
        adj = jnp.zeros((nodes_per_graph, nodes_per_graph), jnp.float32)
        adj = adj.at[jnp.array(src, jnp.int32), jnp.array(dst, jnp.int32)].set(1.0)
        adj = jnp.maximum(adj, adj.T)                           # symmetric
        a_tilde = adj + jnp.eye(nodes_per_graph, dtype=jnp.float32)
        deg = jnp.sum(a_tilde, axis=1)
        d_inv_sqrt = 1.0 / jnp.sqrt(deg)
        blocks.append(a_tilde * d_inv_sqrt[:, None] * d_inv_sqrt[None, :])
    a_blocks = jnp.stack(blocks)                                # (G, npg, npg)

    n = num_graphs * nodes_per_graph
    a_dense = jnp.zeros((n, n), jnp.float32)
    for g in range(num_graphs):
        o = g * nodes_per_graph
        a_dense = a_dense.at[o:o + nodes_per_graph, o:o + nodes_per_graph].set(blocks[g])

    batch = jnp.repeat(jnp.arange(num_graphs, dtype=jnp.int32), nodes_per_graph)
    one_hot = (batch[None, :] == jnp.arange(num_graphs)[:, None]).astype(jnp.float32)
    pool_mean = one_hot / jnp.sum(one_hot, axis=1, keepdims=True)
    return a_blocks, a_dense, pool_mean, one_hot


if __name__ == "__main__":
    key = jax.random.PRNGKey(0)

    input_dim, hidden_dim, num_classes = 3, 64, 10
    num_graphs, nodes_per_graph = 16, 16     # npg multiple of 8 (layout-free pool)
    graphs_per_block = 8                     # 8*16 = 128 node rows per grid step
    n_nodes = num_graphs * nodes_per_graph
    din_pad = 8                              # layer-1 K padded 3 -> 8 for the MXU

    k_x, k_p = jax.random.split(key)
    x = jax.random.normal(k_x, (n_nodes, input_dim), jnp.float32)
    x_pad = jnp.pad(x, ((0, 0), (0, din_pad - input_dim)))
    a_blocks, a_dense, pool_mean, pool_mask = build_graph_blocks(
        num_graphs, nodes_per_graph)
    params = make_params(k_p, input_dim, hidden_dim, num_classes)

    # --- f32 path: strict check vs. original (dense-A, unfolded) semantics
    prep32 = fold_and_pad_params(params, hidden_dim, num_classes,
                                 din_pad=din_pad, compute_dtype=jnp.float32)
    out32 = mnist_gnn_forward(a_blocks.astype(jnp.float32), x_pad, prep32,
                              graphs_per_block, num_classes)
    out32 = jax.block_until_ready(out32)
    ref32 = reference_forward_original(a_dense, x, params, pool_mean, pool_mask)
    assert out32.shape == (num_graphs, num_classes)
    diff32 = float(jnp.max(jnp.abs(out32 - ref32)))
    assert jnp.allclose(out32, ref32, rtol=1e-4, atol=1e-4), (
        f"f32 mismatch: max abs diff {diff32}")
    assert jnp.allclose(jnp.sum(jnp.exp(out32), axis=1), 1.0, atol=1e-4)

    # --- bf16 fast path: MXU operands in bf16, f32 accumulation
    prepbf = fold_and_pad_params(params, hidden_dim, num_classes,
                                 din_pad=din_pad, compute_dtype=jnp.bfloat16)
    outbf = mnist_gnn_forward(a_blocks.astype(jnp.bfloat16), x_pad, prepbf,
                              graphs_per_block, num_classes)
    outbf = jax.block_until_ready(outbf)
    refbf = reference_forward_prepared(a_blocks, x_pad, prepbf, num_classes,
                                       jnp.bfloat16)
    diffbf = float(jnp.max(jnp.abs(outbf - refbf)))
    assert outbf.shape == (num_graphs, num_classes)
    assert jnp.allclose(outbf, refbf, rtol=5e-2, atol=5e-2), (
        f"bf16 mismatch: max abs diff {diffbf}")
    assert jnp.allclose(jnp.sum(jnp.exp(outbf), axis=1), 1.0, atol=1e-3)

    print("KERNEL_OK")
</pallas_src>

<mosaic_0001>
module attributes {stable_mosaic.version = 11 : i64} {
  func.func @mnist_gnn_kernel(%arg0: i32, %arg1: memref<8x16x16xf32, #tpu.memory_space<vmem>>, %arg2: memref<128x8xf32, #tpu.memory_space<vmem>>, %arg3: memref<8x128xf32, #tpu.memory_space<vmem>>, %arg4: memref<1x128xf32, #tpu.memory_space<vmem>>, %arg5: memref<128x128xf32, #tpu.memory_space<vmem>>, %arg6: memref<1x128xf32, #tpu.memory_space<vmem>>, %arg7: memref<128x128xf32, #tpu.memory_space<vmem>>, %arg8: memref<1x128xf32, #tpu.memory_space<vmem>>, %arg9: memref<128x128xf32, #tpu.memory_space<vmem>>, %arg10: memref<128x128xf32, #tpu.memory_space<vmem>>, %arg11: memref<1x128xf32, #tpu.memory_space<vmem>>, %arg12: memref<128x128xf32, #tpu.memory_space<vmem>>, %arg13: memref<1x128xf32, #tpu.memory_space<vmem>>, %arg14: memref<8x128xf32, #tpu.memory_space<vmem>>) attributes {dimension_semantics = [#tpu.dimension_semantics<parallel>], iteration_bounds = array<i64: 2>, scalar_prefetch = 0 : i64, scratch_operands = 0 : i64, tpu.core_type = #tpu.core_type<tc>, window_params = [{transform_indices = @transform_0, window_bounds = array<i64: 8, 16, 16>}, {transform_indices = @transform_1, window_bounds = array<i64: 128, 8>}, {pipeline_mode = #tpu.pipeline_mode<synchronous>, transform_indices = @transform_2, window_bounds = array<i64: 8, 128>}, {pipeline_mode = #tpu.pipeline_mode<synchronous>, transform_indices = @transform_3, window_bounds = array<i64: 1, 128>}, {pipeline_mode = #tpu.pipeline_mode<synchronous>, transform_indices = @transform_4, window_bounds = array<i64: 128, 128>}, {pipeline_mode = #tpu.pipeline_mode<synchronous>, transform_indices = @transform_5, window_bounds = array<i64: 1, 128>}, {pipeline_mode = #tpu.pipeline_mode<synchronous>, transform_indices = @transform_6, window_bounds = array<i64: 128, 128>}, {pipeline_mode = #tpu.pipeline_mode<synchronous>, transform_indices = @transform_7, window_bounds = array<i64: 1, 128>}, {pipeline_mode = #tpu.pipeline_mode<synchronous>, transform_indices = @transform_8, window_bounds = array<i64: 128, 128>}, {pipeline_mode = #tpu.pipeline_mode<synchronous>, transform_indices = @transform_9, window_bounds = array<i64: 128, 128>}, {pipeline_mode = #tpu.pipeline_mode<synchronous>, transform_indices = @transform_10, window_bounds = array<i64: 1, 128>}, {pipeline_mode = #tpu.pipeline_mode<synchronous>, transform_indices = @transform_11, window_bounds = array<i64: 128, 128>}, {pipeline_mode = #tpu.pipeline_mode<synchronous>, transform_indices = @transform_12, window_bounds = array<i64: 1, 128>}, {transform_indices = @transform_13, window_bounds = array<i64: 8, 128>}]} {
    %c0 = arith.constant 0 : index
    %c0_0 = arith.constant 0 : index
    %c0_1 = arith.constant 0 : index
    %0 = vector.load %arg1[%c0, %c0_0, %c0_1] : memref<8x16x16xf32, #tpu.memory_space<vmem>>, vector<8x16x16xf32>
    %c0_2 = arith.constant 0 : index
    %c0_3 = arith.constant 0 : index
    %1 = vector.load %arg2[%c0_2, %c0_3] : memref<128x8xf32, #tpu.memory_space<vmem>>, vector<128x8xf32>
    %c0_4 = arith.constant 0 : index
    %c0_5 = arith.constant 0 : index
    %2 = vector.load %arg3[%c0_4, %c0_5] : memref<8x128xf32, #tpu.memory_space<vmem>>, vector<8x128xf32>
    %cst = arith.constant dense<0.000000e+00> : vector<128x128xf32>
    %3 = tpu.matmul %1, %2, %cst {dimension_numbers = #tpu.dot_dimension_numbers<[1], [0], [0], [1], [0, 0, 1, 1], [], []>} : vector<128x8xf32>, vector<8x128xf32>, vector<128x128xf32> -> vector<128x128xf32>
    %4 = vector.shape_cast %3 : vector<128x128xf32> to vector<8x16x128xf32>
    "tpu.trace_start"() <{level = 10 : i32, message = "gij,gjh->gih"}> : () -> ()
    %cst_6 = arith.constant dense<0.000000e+00> : vector<8x16x128xf32>
    %5 = tpu.matmul %0, %4, %cst_6 {dimension_numbers = #tpu.dot_dimension_numbers<[2], [1], [1], [2], [0, 0, 0, 1, 1, 2], [0], [0]>} : vector<8x16x16xf32>, vector<8x16x128xf32>, vector<8x16x128xf32> -> vector<8x16x128xf32>
    "tpu.trace_stop"() : () -> ()
    %6 = vector.shape_cast %5 : vector<8x16x128xf32> to vector<128x128xf32>
    %c0_7 = arith.constant 0 : index
    %c0_8 = arith.constant 0 : index
    %7 = vector.load %arg4[%c0_7, %c0_8] : memref<1x128xf32, #tpu.memory_space<vmem>>, vector<1x128xf32>
    %8 = vector.broadcast %7 : vector<1x128xf32> to vector<128x128xf32>
    %9 = arith.addf %6, %8 : vector<128x128xf32>
    %cst_9 = arith.constant 0.000000e+00 : f32
    %10 = vector.broadcast %cst_9 : f32 to vector<128x128xf32>
    %11 = arith.maximumf %9, %10 : vector<128x128xf32>
    %c0_10 = arith.constant 0 : index
    %c0_11 = arith.constant 0 : index
    %12 = vector.load %arg5[%c0_10, %c0_11] : memref<128x128xf32, #tpu.memory_space<vmem>>, vector<128x128xf32>
    %cst_12 = arith.constant dense<0.000000e+00> : vector<128x128xf32>
    %13 = tpu.matmul %11, %12, %cst_12 {dimension_numbers = #tpu.dot_dimension_numbers<[1], [0], [0], [1], [0, 0, 1, 1], [], []>} : vector<128x128xf32>, vector<128x128xf32>, vector<128x128xf32> -> vector<128x128xf32>
    %14 = vector.shape_cast %13 : vector<128x128xf32> to vector<8x16x128xf32>
    "tpu.trace_start"() <{level = 10 : i32, message = "gij,gjh->gih"}> : () -> ()
    %cst_13 = arith.constant dense<0.000000e+00> : vector<8x16x128xf32>
    %15 = tpu.matmul %0, %14, %cst_13 {dimension_numbers = #tpu.dot_dimension_numbers<[2], [1], [1], [2], [0, 0, 0, 1, 1, 2], [0], [0]>} : vector<8x16x16xf32>, vector<8x16x128xf32>, vector<8x16x128xf32> -> vector<8x16x128xf32>
    "tpu.trace_stop"() : () -> ()
    %16 = vector.shape_cast %15 : vector<8x16x128xf32> to vector<128x128xf32>
    %c0_14 = arith.constant 0 : index
    %c0_15 = arith.constant 0 : index
    %17 = vector.load %arg6[%c0_14, %c0_15] : memref<1x128xf32, #tpu.memory_space<vmem>>, vector<1x128xf32>
    %18 = vector.broadcast %17 : vector<1x128xf32> to vector<128x128xf32>
    %19 = arith.addf %16, %18 : vector<128x128xf32>
    %cst_16 = arith.constant 0.000000e+00 : f32
    %20 = vector.broadcast %cst_16 : f32 to vector<128x128xf32>
    %21 = arith.maximumf %19, %20 : vector<128x128xf32>
    %c0_17 = arith.constant 0 : index
    %c0_18 = arith.constant 0 : index
    %22 = vector.load %arg7[%c0_17, %c0_18] : memref<128x128xf32, #tpu.memory_space<vmem>>, vector<128x128xf32>
    %cst_19 = arith.constant dense<0.000000e+00> : vector<128x128xf32>
    %23 = tpu.matmul %21, %22, %cst_19 {dimension_numbers = #tpu.dot_dimension_numbers<[1], [0], [0], [1], [0, 0, 1, 1], [], []>} : vector<128x128xf32>, vector<128x128xf32>, vector<128x128xf32> -> vector<128x128xf32>
    %24 = vector.shape_cast %23 : vector<128x128xf32> to vector<8x16x128xf32>
    "tpu.trace_start"() <{level = 10 : i32, message = "gij,gjh->gih"}> : () -> ()
    %cst_20 = arith.constant dense<0.000000e+00> : vector<8x16x128xf32>
    %25 = tpu.matmul %0, %24, %cst_20 {dimension_numbers = #tpu.dot_dimension_numbers<[2], [1], [1], [2], [0, 0, 0, 1, 1, 2], [0], [0]>} : vector<8x16x16xf32>, vector<8x16x128xf32>, vector<8x16x128xf32> -> vector<8x16x128xf32>
    "tpu.trace_stop"() : () -> ()
    %26 = vector.shape_cast %25 : vector<8x16x128xf32> to vector<128x128xf32>
    %c0_21 = arith.constant 0 : index
    %c0_22 = arith.constant 0 : index
    %27 = vector.load %arg8[%c0_21, %c0_22] : memref<1x128xf32, #tpu.memory_space<vmem>>, vector<1x128xf32>
    %28 = vector.broadcast %27 : vector<1x128xf32> to vector<128x128xf32>
    %29 = arith.addf %26, %28 : vector<128x128xf32>
    %30 = vector.shape_cast %29 : vector<128x128xf32> to vector<8x16x128xf32>
    %cst_23 = arith.constant dense<0.000000e+00> : vector<8x128xf32>
    %31 = vector.multi_reduction <add>, %30, %cst_23 [1] : vector<8x16x128xf32> to vector<8x128xf32>
    %cst_24 = arith.constant 6.250000e-02 : f32
    %32 = vector.broadcast %cst_24 : f32 to vector<8x128xf32>
    %33 = arith.mulf %31, %32 : vector<8x128xf32>
    %cst_25 = arith.constant dense<0xFF800000> : vector<8x128xf32>
    %34 = vector.multi_reduction <maximumf>, %30, %cst_25 [1] : vector<8x16x128xf32> to vector<8x128xf32>
    %c0_26 = arith.constant 0 : index
    %c0_27 = arith.constant 0 : index
    %35 = vector.load %arg9[%c0_26, %c0_27] : memref<128x128xf32, #tpu.memory_space<vmem>>, vector<128x128xf32>
    %cst_28 = arith.constant dense<0.000000e+00> : vector<8x128xf32>
    %36 = tpu.matmul %33, %35, %cst_28 {dimension_numbers = #tpu.dot_dimension_numbers<[1], [0], [0], [1], [0, 0, 1, 1], [], []>} : vector<8x128xf32>, vector<128x128xf32>, vector<8x128xf32> -> vector<8x128xf32>
    %c0_29 = arith.constant 0 : index
    %c0_30 = arith.constant 0 : index
    %37 = vector.load %arg10[%c0_29, %c0_30] : memref<128x128xf32, #tpu.memory_space<vmem>>, vector<128x128xf32>
    %cst_31 = arith.constant dense<0.000000e+00> : vector<8x128xf32>
    %38 = tpu.matmul %34, %37, %cst_31 {dimension_numbers = #tpu.dot_dimension_numbers<[1], [0], [0], [1], [0, 0, 1, 1], [], []>} : vector<8x128xf32>, vector<128x128xf32>, vector<8x128xf32> -> vector<8x128xf32>
    %39 = arith.addf %36, %38 : vector<8x128xf32>
    %c0_32 = arith.constant 0 : index
    %c0_33 = arith.constant 0 : index
    %40 = vector.load %arg11[%c0_32, %c0_33] : memref<1x128xf32, #tpu.memory_space<vmem>>, vector<1x128xf32>
    %41 = vector.broadcast %40 : vector<1x128xf32> to vector<8x128xf32>
    %42 = arith.addf %39, %41 : vector<8x128xf32>
    %cst_34 = arith.constant 0.000000e+00 : f32
    %43 = vector.broadcast %cst_34 : f32 to vector<8x128xf32>
    %44 = arith.maximumf %42, %43 : vector<8x128xf32>
    %c0_35 = arith.constant 0 : index
    %c0_36 = arith.constant 0 : index
    %45 = vector.load %arg12[%c0_35, %c0_36] : memref<128x128xf32, #tpu.memory_space<vmem>>, vector<128x128xf32>
    %cst_37 = arith.constant dense<0.000000e+00> : vector<8x128xf32>
    %46 = tpu.matmul %44, %45, %cst_37 {dimension_numbers = #tpu.dot_dimension_numbers<[1], [0], [0], [1], [0, 0, 1, 1], [], []>} : vector<8x128xf32>, vector<128x128xf32>, vector<8x128xf32> -> vector<8x128xf32>
    %c0_38 = arith.constant 0 : index
    %c0_39 = arith.constant 0 : index
    %47 = vector.load %arg13[%c0_38, %c0_39] : memref<1x128xf32, #tpu.memory_space<vmem>>, vector<1x128xf32>
    %48 = vector.broadcast %47 : vector<1x128xf32> to vector<8x128xf32>
    %49 = arith.addf %46, %48 : vector<8x128xf32>
    %cst_40 = arith.constant dense<0xFF800000> : vector<8xf32>
    %50 = vector.multi_reduction <maximumf>, %49, %cst_40 [1] : vector<8x128xf32> to vector<8xf32>
    %51 = vector.shape_cast %50 : vector<8xf32> to vector<8x1xf32>
    %52 = vector.broadcast %51 : vector<8x1xf32> to vector<8x128xf32>
    %53 = arith.subf %49, %52 : vector<8x128xf32>
    %54 = math.exp %53 : vector<8x128xf32>
    %cst_41 = arith.constant dense<0.000000e+00> : vector<8xf32>
    %55 = vector.multi_reduction <add>, %54, %cst_41 [1] : vector<8x128xf32> to vector<8xf32>
    %56 = vector.shape_cast %55 : vector<8xf32> to vector<8x1xf32>
    %57 = math.log %56 : vector<8x1xf32>
    %58 = vector.broadcast %57 : vector<8x1xf32> to vector<8x128xf32>
    %59 = arith.subf %53, %58 : vector<8x128xf32>
    %c0_42 = arith.constant 0 : index
    %c0_43 = arith.constant 0 : index
    %60 = vector.load %arg14[%c0_42, %c0_43] : memref<8x128xf32, #tpu.memory_space<vmem>>, vector<8x128xf32>
    tpu.vector_store %arg14[%c0_42, %c0_43], %59 {strides = array<i32>} : memref<8x128xf32, #tpu.memory_space<vmem>>, vector<8x128xf32>,
    return
  }
  func.func @transform_0(%arg0: i32) -> (i32, i32, i32) {
    %c0_i32 = arith.constant 0 : i32
    %c0_i32_0 = arith.constant 0 : i32
    %c0_i32_1 = arith.constant 0 : i32
    return %arg0, %c0_i32, %c0_i32_0 : i32, i32, i32
  }
  func.func @transform_1(%arg0: i32) -> (i32, i32) {
    %c0_i32 = arith.constant 0 : i32
    %c0_i32_0 = arith.constant 0 : i32
    return %arg0, %c0_i32 : i32, i32
  }
  func.func @transform_2(%arg0: i32) -> (i32, i32) {
    %c0_i32 = arith.constant 0 : i32
    %c0_i32_0 = arith.constant 0 : i32
    %c0_i32_1 = arith.constant 0 : i32
    return %c0_i32, %c0_i32_0 : i32, i32
  }
  func.func @transform_3(%arg0: i32) -> (i32, i32) {
    %c0_i32 = arith.constant 0 : i32
    %c0_i32_0 = arith.constant 0 : i32
    %c0_i32_1 = arith.constant 0 : i32
    return %c0_i32, %c0_i32_0 : i32, i32
  }
  func.func @transform_4(%arg0: i32) -> (i32, i32) {
    %c0_i32 = arith.constant 0 : i32
    %c0_i32_0 = arith.constant 0 : i32
    %c0_i32_1 = arith.constant 0 : i32
    return %c0_i32, %c0_i32_0 : i32, i32
  }
  func.func @transform_5(%arg0: i32) -> (i32, i32) {
    %c0_i32 = arith.constant 0 : i32
    %c0_i32_0 = arith.constant 0 : i32
    %c0_i32_1 = arith.constant 0 : i32
    return %c0_i32, %c0_i32_0 : i32, i32
  }
  func.func @transform_6(%arg0: i32) -> (i32, i32) {
    %c0_i32 = arith.constant 0 : i32
    %c0_i32_0 = arith.constant 0 : i32
    %c0_i32_1 = arith.constant 0 : i32
    return %c0_i32, %c0_i32_0 : i32, i32
  }
  func.func @transform_7(%arg0: i32) -> (i32, i32) {
    %c0_i32 = arith.constant 0 : i32
    %c0_i32_0 = arith.constant 0 : i32
    %c0_i32_1 = arith.constant 0 : i32
    return %c0_i32, %c0_i32_0 : i32, i32
  }
  func.func @transform_8(%arg0: i32) -> (i32, i32) {
    %c0_i32 = arith.constant 0 : i32
    %c0_i32_0 = arith.constant 0 : i32
    %c0_i32_1 = arith.constant 0 : i32
    return %c0_i32, %c0_i32_0 : i32, i32
  }
  func.func @transform_9(%arg0: i32) -> (i32, i32) {
    %c0_i32 = arith.constant 0 : i32
    %c0_i32_0 = arith.constant 0 : i32
    %c0_i32_1 = arith.constant 0 : i32
    return %c0_i32, %c0_i32_0 : i32, i32
  }
  func.func @transform_10(%arg0: i32) -> (i32, i32) {
    %c0_i32 = arith.constant 0 : i32
    %c0_i32_0 = arith.constant 0 : i32
    %c0_i32_1 = arith.constant 0 : i32
    return %c0_i32, %c0_i32_0 : i32, i32
  }
  func.func @transform_11(%arg0: i32) -> (i32, i32) {
    %c0_i32 = arith.constant 0 : i32
    %c0_i32_0 = arith.constant 0 : i32
    %c0_i32_1 = arith.constant 0 : i32
    return %c0_i32, %c0_i32_0 : i32, i32
  }
  func.func @transform_12(%arg0: i32) -> (i32, i32) {
    %c0_i32 = arith.constant 0 : i32
    %c0_i32_0 = arith.constant 0 : i32
    %c0_i32_1 = arith.constant 0 : i32
    return %c0_i32, %c0_i32_0 : i32, i32
  }
  func.func @transform_13(%arg0: i32) -> (i32, i32) {
    %c0_i32 = arith.constant 0 : i32
    %c0_i32_0 = arith.constant 0 : i32
    return %arg0, %c0_i32 : i32, i32
  }
}

</mosaic_0001>

<llo_original>
// kernel: mnist_gnn_forward.1
$region0: #{mnist_gnn_forward.1}
  #allocation0 [shape = 'u32[]', space=smem, size = 0x4, offset = 0x4, fixed_abs, tag = 'smem constant byte address 0x4 - core index']
  #allocation1 [shape = 'u32[72,128]{1,0:T(1,128)}', space=vmem, size = 0x9000, scoped, tag = 'internal scratch']
  %s0 = inlined_call_operand.vmem [shape: f32[16,16,16], index: 0, kind: input, shape index: {}]
  %s1 = inlined_call_operand.vmem [shape: f32[256,8], index: 1, kind: input, shape index: {}]
  %s2 = inlined_call_operand.vmem [shape: f32[8,128], index: 2, kind: input, shape index: {}]
  %s3 = inlined_call_operand.vmem [shape: f32[1,128], index: 3, kind: input, shape index: {}]
  %s4 = inlined_call_operand.hbm [shape: f32[128,128], index: 4, kind: input, shape index: {}]
  %s5 = inlined_call_operand.vmem [shape: f32[1,128], index: 5, kind: input, shape index: {}]
  %s6 = inlined_call_operand.hbm [shape: f32[128,128], index: 6, kind: input, shape index: {}]
  %s7 = inlined_call_operand.vmem [shape: f32[1,128], index: 7, kind: input, shape index: {}]
  %s8 = inlined_call_operand.hbm [shape: f32[128,128], index: 8, kind: input, shape index: {}]
  %s9 = inlined_call_operand.hbm [shape: f32[128,128], index: 9, kind: input, shape index: {}]
  %s10 = inlined_call_operand.vmem [shape: f32[1,128], index: 10, kind: input, shape index: {}]
  %s11 = inlined_call_operand.hbm [shape: f32[128,128], index: 11, kind: input, shape index: {}]
  %s12 = inlined_call_operand.vmem [shape: f32[1,128], index: 12, kind: input, shape index: {}]
  %s13 = inlined_call_operand.hbm [shape: f32[16,128], index: 13, kind: output, shape index: {}]
  %s14 = sld [smem:[#allocation0]]
  $region105: #{mnist_gnn_forward.1} parent=0
    _
  %s16 = ssub.s32 1, %s14
  %s17 = scalar_select 0, %s16, %s14
  $region1: #{mnist_gnn_forward.1} parent=0
    #allocation2 [shape = 'u8[65536]{0}', space=vmem, size = 0x10000, scoped, tag = 'input window, operand 4, single buffered']
    #allocation3 [shape = 's32[2]{0}', space=sflag, size = 0x8, scoped, tag = 'scoped memory for mnist_gnn_forward.1']
    #allocation4 [shape = 's32[2]{0}', space=sflag, size = 0x8, scoped, tag = 'scoped memory for mnist_gnn_forward.1']
    #allocation5 [shape = 'u8[65536]{0}', space=vmem, size = 0x10000, scoped, tag = 'input window, operand 6, single buffered']
    #allocation6 [shape = 's32[1]{0}', space=sflag, size = 0x4, scoped, tag = 'scoped memory for mnist_gnn_forward.1']
    #allocation7 [shape = 'u8[65536]{0}', space=vmem, size = 0x10000, scoped, tag = 'input window, operand 8, single buffered']
    #allocation8 [shape = 'u8[65536]{0}', space=vmem, size = 0x10000, scoped, tag = 'input window, operand 9, single buffered']
    #allocation9 [shape = 's32[1]{0}', space=sflag, size = 0x4, scoped, tag = 'scoped memory for mnist_gnn_forward.1']
    #allocation10 [shape = 'u8[65536]{0}', space=vmem, size = 0x10000, scoped, tag = 'input window, operand 11, single buffered']
    #allocation11 [shape = 'u8[8192]{0}', space=vmem, size = 0x2000, scoped, tag = 'output window, operand 0']
    %18 = vsyncpa [#allocation3], 0
    %19 = vsyncpa [#allocation6], 0
    %20 = vsyncpa [#allocation9], 0
    %21 = vsyncpa [#allocation4], 0
    %s22 = scalar_lea.sflag [#allocation4], 1
    %23 = vsyncpa %s22, 0
    loop: start=0, step=1, limit=4
    $region2: #{mnist_gnn_forward.1} parent=1 // loop_pre_header
      _
    $region3: #{mnist_gnn_forward.1} parent=1 // loop_header
      %s25 = sphi 0, %s29
      %p26 = scmp.ge.s32.totalorder %s25, 4
      %s35 = sphi 0, %s37
      %s38 = sphi 0, %s35
      %s39 = sphi 0, %s38
      %s55 = sphi 0, %s39
      %s61 = sphi 0, %s63
      %s64 = sphi 0, %s61
      %s65 = sphi 0, %s64
      %s81 = sphi 0, %s65
      %s85 = sphi 0, %s85
      %s87 = sphi 0, %s85
      %s88 = sphi 0, %s87
      %s102 = sphi 0, %s88
      %s106 = sphi 0, %s106
      %s108 = sphi 0, %s106
      %s109 = sphi 0, %s108
      %s123 = sphi 0, %s109
      %s127 = sphi 0, %s127
      %s129 = sphi 0, %s127
      %s130 = sphi 0, %s129
      %s144 = sphi 0, %s130
      %s148 = sphi 0, %s148
      %s150 = sphi 0, %s148
      %s151 = sphi 0, %s150
      %s165 = sphi 0, %s151
      %s169 = sphi 0, %s169
      %s171 = sphi 0, %s169
      %s172 = sphi 0, %s171
      %s186 = sphi 0, %s172
      %s190 = sphi 0, %s190
      %s192 = sphi 0, %s190
      %s193 = sphi 0, %s192
      %s207 = sphi 0, %s193
      %s211 = sphi 0, %s211
      %s213 = sphi 0, %s211
      %s214 = sphi 0, %s213
      %s228 = sphi 0, %s214
      %s232 = sphi 0, %s232
      %s234 = sphi 0, %s232
      %s235 = sphi 0, %s234
      %s249 = sphi 0, %s235
      %s253 = sphi 0, %s253
      %s255 = sphi 0, %s253
      %s256 = sphi 0, %s255
      %s270 = sphi 0, %s256
      %s274 = sphi 0, %s274
      %s276 = sphi 0, %s274
      %s277 = sphi 0, %s276
      %s291 = sphi 0, %s277
      %s295 = sphi 0, %s295
      %s297 = sphi 0, %s295
      %s298 = sphi 0, %s297
      %s312 = sphi 0, %s298
      %s318 = sphi 0, %s320
      %s321 = sphi 0, %s318
      %s322 = sphi 0, %s321
      %s338 = sphi 0, %s322
    $region4: #{mnist_gnn_forward.1} parent=1 // loop_header_branch
      %28 = sbr.rel (%p26) target = $region8
    $region5: #{mnist_gnn_forward.1} parent=1 // loop_body
      %s30 = ssub.s32 %s25, 1
      %s31 = ssub.s32 %s25, 2
      %s32 = sadd.s32 %s25, 1
      %s33 = ssub.s32 %s25, %s32
      %p34 = scmp.eq.s32.totalorder %s33, 0
      %s36 = sadd.s32 %s35, 1
      %s37 = scalar_select %p34, %s35, %s36
      %p40 = pneg %p34
      %p41 = scmp.eq.s32.totalorder %s25, 1
      %p42 = por %p40, %p41
      %p43 = scmp.ne.s32.totalorder %s35, %s38
      %p44 = scmp.eq.s32.totalorder %s25, 0
      %p45 = por %p43, %p44
      %p46 = scmp.ne.s32.totalorder %s35, %s38
      %p47 = scmp.eq.s32.totalorder %s30, 1
      %p48 = por %p46, %p47
      %p49 = scmp.ne.s32.totalorder %s38, %s39
      %p50 = scmp.eq.s32.totalorder %s30, 0
      %p51 = por %p49, %p50
      %p52 = scmp.ne.s32.totalorder %s38, %s39
      %p53 = scmp.eq.s32.totalorder %s31, 1
      %p54 = por %p52, %p53
      %p56 = scmp.ne.s32.totalorder %s39, %s55
      %p57 = scmp.eq.s32.totalorder %s31, 0
      %p58 = por %p56, %p57
      %s59 = ssub.s32 %s25, %s32
      %p60 = scmp.eq.s32.totalorder %s59, 0
      %s62 = sadd.s32 %s61, 1
      %s63 = scalar_select %p60, %s61, %s62
      %p66 = pneg %p60
      %p67 = scmp.eq.s32.totalorder %s25, 1
      %p68 = por %p66, %p67
      %p69 = scmp.ne.s32.totalorder %s61, %s64
      %p70 = scmp.eq.s32.totalorder %s25, 0
      %p71 = por %p69, %p70
      %p72 = scmp.ne.s32.totalorder %s61, %s64
      %p73 = scmp.eq.s32.totalorder %s30, 1
      %p74 = por %p72, %p73
      %p75 = scmp.ne.s32.totalorder %s64, %s65
      %p76 = scmp.eq.s32.totalorder %s30, 0
      %p77 = por %p75, %p76
      %p78 = scmp.ne.s32.totalorder %s64, %s65
      %p79 = scmp.eq.s32.totalorder %s31, 1
      %p80 = por %p78, %p79
      %p82 = scmp.ne.s32.totalorder %s65, %s81
      %p83 = scmp.eq.s32.totalorder %s31, 0
      %p84 = por %p82, %p83
      %s86 = sadd.s32 %s85, 1
      %p89 = scmp.eq.s32.totalorder %s25, 1
      %p90 = scmp.ne.s32.totalorder %s85, %s87
      %p91 = scmp.eq.s32.totalorder %s25, 0
      %p92 = por %p90, %p91
      %p93 = scmp.ne.s32.totalorder %s85, %s87
      %p94 = scmp.eq.s32.totalorder %s30, 1
      %p95 = por %p93, %p94
      %p96 = scmp.ne.s32.totalorder %s87, %s88
      %p97 = scmp.eq.s32.totalorder %s30, 0
      %p98 = por %p96, %p97
      %p99 = scmp.ne.s32.totalorder %s87, %s88
      %p100 = scmp.eq.s32.totalorder %s31, 1
      %p101 = por %p99, %p100
      %p103 = scmp.ne.s32.totalorder %s88, %s102
      %p104 = scmp.eq.s32.totalorder %s31, 0
      %p105 = por %p103, %p104
      %s107 = sadd.s32 %s106, 1
      %p110 = scmp.eq.s32.totalorder %s25, 1
      %p111 = scmp.ne.s32.totalorder %s106, %s108
      %p112 = scmp.eq.s32.totalorder %s25, 0
      %p113 = por %p111, %p112
      %p114 = scmp.ne.s32.totalorder %s106, %s108
      %p115 = scmp.eq.s32.totalorder %s30, 1
      %p116 = por %p114, %p115
      %p117 = scmp.ne.s32.totalorder %s108, %s109
      %p118 = scmp.eq.s32.totalorder %s30, 0
      %p119 = por %p117, %p118
      %p120 = scmp.ne.s32.totalorder %s108, %s109
      %p121 = scmp.eq.s32.totalorder %s31, 1
      %p122 = por %p120, %p121
      %p124 = scmp.ne.s32.totalorder %s109, %s123
      %p125 = scmp.eq.s32.totalorder %s31, 0
      %p126 = por %p124, %p125
      %s128 = sadd.s32 %s127, 1
      %p131 = scmp.eq.s32.totalorder %s25, 1
      %p132 = scmp.ne.s32.totalorder %s127, %s129
      %p133 = scmp.eq.s32.totalorder %s25, 0
      %p134 = por %p132, %p133
      %p135 = scmp.ne.s32.totalorder %s127, %s129
      %p136 = scmp.eq.s32.totalorder %s30, 1
      %p137 = por %p135, %p136
      %p138 = scmp.ne.s32.totalorder %s129, %s130
      %p139 = scmp.eq.s32.totalorder %s30, 0
      %p140 = por %p138, %p139
      %p141 = scmp.ne.s32.totalorder %s129, %s130
      %p142 = scmp.eq.s32.totalorder %s31, 1
      %p143 = por %p141, %p142
      %p145 = scmp.ne.s32.totalorder %s130, %s144
      %p146 = scmp.eq.s32.totalorder %s31, 0
      %p147 = por %p145, %p146
      %s149 = sadd.s32 %s148, 1
      %p152 = scmp.eq.s32.totalorder %s25, 1
      %p153 = scmp.ne.s32.totalorder %s148, %s150
      %p154 = scmp.eq.s32.totalorder %s25, 0
      %p155 = por %p153, %p154
      %p156 = scmp.ne.s32.totalorder %s148, %s150
      %p157 = scmp.eq.s32.totalorder %s30, 1
      %p158 = por %p156, %p157
      %p159 = scmp.ne.s32.totalorder %s150, %s151
      %p160 = scmp.eq.s32.totalorder %s30, 0
      %p161 = por %p159, %p160
      %p162 = scmp.ne.s32.totalorder %s150, %s151
      %p163 = scmp.eq.s32.totalorder %s31, 1
      %p164 = por %p162, %p163
      %p166 = scmp.ne.s32.totalorder %s151, %s165
      %p167 = scmp.eq.s32.totalorder %s31, 0
      %p168 = por %p166, %p167
      %s170 = sadd.s32 %s169, 1
      %p173 = scmp.eq.s32.totalorder %s25, 1
      %p174 = scmp.ne.s32.totalorder %s169, %s171
      %p175 = scmp.eq.s32.totalorder %s25, 0
      %p176 = por %p174, %p175
      %p177 = scmp.ne.s32.totalorder %s169, %s171
      %p178 = scmp.eq.s32.totalorder %s30, 1
      %p179 = por %p177, %p178
      %p180 = scmp.ne.s32.totalorder %s171, %s172
      %p181 = scmp.eq.s32.totalorder %s30, 0
      %p182 = por %p180, %p181
      %p183 = scmp.ne.s32.totalorder %s171, %s172
      %p184 = scmp.eq.s32.totalorder %s31, 1
      %p185 = por %p183, %p184
      %p187 = scmp.ne.s32.totalorder %s172, %s186
      %p188 = scmp.eq.s32.totalorder %s31, 0
      %p189 = por %p187, %p188
      %s191 = sadd.s32 %s190, 1
      %p194 = scmp.eq.s32.totalorder %s25, 1
      %p195 = scmp.ne.s32.totalorder %s190, %s192
      %p196 = scmp.eq.s32.totalorder %s25, 0
      %p197 = por %p195, %p196
      %p198 = scmp.ne.s32.totalorder %s190, %s192
      %p199 = scmp.eq.s32.totalorder %s30, 1
      %p200 = por %p198, %p199
      %p201 = scmp.ne.s32.totalorder %s192, %s193
      %p202 = scmp.eq.s32.totalorder %s30, 0
      %p203 = por %p201, %p202
      %p204 = scmp.ne.s32.totalorder %s192, %s193
      %p205 = scmp.eq.s32.totalorder %s31, 1
      %p206 = por %p204, %p205
      %p208 = scmp.ne.s32.totalorder %s193, %s207
      %p209 = scmp.eq.s32.totalorder %s31, 0
      %p210 = por %p208, %p209
      %s212 = sadd.s32 %s211, 1
      %p215 = scmp.eq.s32.totalorder %s25, 1
      %p216 = scmp.ne.s32.totalorder %s211, %s213
      %p217 = scmp.eq.s32.totalorder %s25, 0
      %p218 = por %p216, %p217
      %p219 = scmp.ne.s32.totalorder %s211, %s213
      %p220 = scmp.eq.s32.totalorder %s30, 1
      %p221 = por %p219, %p220
      %p222 = scmp.ne.s32.totalorder %s213, %s214
      %p223 = scmp.eq.s32.totalorder %s30, 0
      %p224 = por %p222, %p223
      %p225 = scmp.ne.s32.totalorder %s213, %s214
      %p226 = scmp.eq.s32.totalorder %s31, 1
      %p227 = por %p225, %p226
      %p229 = scmp.ne.s32.totalorder %s214, %s228
      %p230 = scmp.eq.s32.totalorder %s31, 0
      %p231 = por %p229, %p230
      %s233 = sadd.s32 %s232, 1
      %p236 = scmp.eq.s32.totalorder %s25, 1
      %p237 = scmp.ne.s32.totalorder %s232, %s234
      %p238 = scmp.eq.s32.totalorder %s25, 0
      %p239 = por %p237, %p238
      %p240 = scmp.ne.s32.totalorder %s232, %s234
      %p241 = scmp.eq.s32.totalorder %s30, 1
      %p242 = por %p240, %p241
      %p243 = scmp.ne.s32.totalorder %s234, %s235
      %p244 = scmp.eq.s32.totalorder %s30, 0
      %p245 = por %p243, %p244
      %p246 = scmp.ne.s32.totalorder %s234, %s235
      %p247 = scmp.eq.s32.totalorder %s31, 1
      %p248 = por %p246, %p247
      %p250 = scmp.ne.s32.totalorder %s235, %s249
      %p251 = scmp.eq.s32.totalorder %s31, 0
      %p252 = por %p250, %p251
      %s254 = sadd.s32 %s253, 1
      %p257 = scmp.eq.s32.totalorder %s25, 1
      %p258 = scmp.ne.s32.totalorder %s253, %s255
      %p259 = scmp.eq.s32.totalorder %s25, 0
      %p260 = por %p258, %p259
      %p261 = scmp.ne.s32.totalorder %s253, %s255
      %p262 = scmp.eq.s32.totalorder %s30, 1
      %p263 = por %p261, %p262
      %p264 = scmp.ne.s32.totalorder %s255, %s256
      %p265 = scmp.eq.s32.totalorder %s30, 0
      %p266 = por %p264, %p265
      %p267 = scmp.ne.s32.totalorder %s255, %s256
      %p268 = scmp.eq.s32.totalorder %s31, 1
      %p269 = por %p267, %p268
      %p271 = scmp.ne.s32.totalorder %s256, %s270
      %p272 = scmp.eq.s32.totalorder %s31, 0
      %p273 = por %p271, %p272
      %s275 = sadd.s32 %s274, 1
      %p278 = scmp.eq.s32.totalorder %s25, 1
      %p279 = scmp.ne.s32.totalorder %s274, %s276
      %p280 = scmp.eq.s32.totalorder %s25, 0
      %p281 = por %p279, %p280
      %p282 = scmp.ne.s32.totalorder %s274, %s276
      %p283 = scmp.eq.s32.totalorder %s30, 1
      %p284 = por %p282, %p283
      %p285 = scmp.ne.s32.totalorder %s276, %s277
      %p286 = scmp.eq.s32.totalorder %s30, 0
      %p287 = por %p285, %p286
      %p288 = scmp.ne.s32.totalorder %s276, %s277
      %p289 = scmp.eq.s32.totalorder %s31, 1
      %p290 = por %p288, %p289
      %p292 = scmp.ne.s32.totalorder %s277, %s291
      %p293 = scmp.eq.s32.totalorder %s31, 0
      %p294 = por %p292, %p293
      %s296 = sadd.s32 %s295, 1
      %p299 = scmp.eq.s32.totalorder %s25, 1
      %p300 = scmp.ne.s32.totalorder %s295, %s297
      %p301 = scmp.eq.s32.totalorder %s25, 0
      %p302 = por %p300, %p301
      %p303 = scmp.ne.s32.totalorder %s295, %s297
      %p304 = scmp.eq.s32.totalorder %s30, 1
      %p305 = por %p303, %p304
      %p306 = scmp.ne.s32.totalorder %s297, %s298
      %p307 = scmp.eq.s32.totalorder %s30, 0
      %p308 = por %p306, %p307
      %p309 = scmp.ne.s32.totalorder %s297, %s298
      %p310 = scmp.eq.s32.totalorder %s31, 1
      %p311 = por %p309, %p310
      %p313 = scmp.ne.s32.totalorder %s298, %s312
      %p314 = scmp.eq.s32.totalorder %s31, 0
      %p315 = por %p313, %p314
      %s316 = ssub.s32 %s25, %s32
      %p317 = scmp.eq.s32.totalorder %s316, 0
      %s319 = sadd.s32 %s318, 1
      %s320 = scalar_select %p317, %s318, %s319
      %p323 = pneg %p317
      %p324 = scmp.eq.s32.totalorder %s25, 1
      %p325 = por %p323, %p324
      %p326 = scmp.ne.s32.totalorder %s318, %s321
      %p327 = scmp.eq.s32.totalorder %s25, 0
      %p328 = por %p326, %p327
      %p329 = scmp.ne.s32.totalorder %s318, %s321
      %p330 = scmp.eq.s32.totalorder %s30, 1
      %p331 = por %p329, %p330
      %p332 = scmp.ne.s32.totalorder %s321, %s322
      %p333 = scmp.eq.s32.totalorder %s30, 0
      %p334 = por %p332, %p333
      %p335 = scmp.ne.s32.totalorder %s321, %s322
      %p336 = scmp.eq.s32.totalorder %s31, 1
      %p337 = por %p335, %p336
      %p339 = scmp.ne.s32.totalorder %s322, %s338
      %p340 = scmp.eq.s32.totalorder %s31, 0
      %p341 = por %p339, %p340
      %p342 = scmp.le.s32.totalorder 1, %s25
      %p343 = scmp.lt.s32.totalorder %s25, 3
      %p344 = pnand %p342, %p343
      %p345 = pneg %p344
      // Predicated region
      $region9: #{mnist_gnn_forward.1} parent=5 // pred_check
        _
      $region10: #{mnist_gnn_forward.1} parent=5 // pred_check_branch
        %347 = sbr.rel (%p344) target = $region12
      $region11: #{mnist_gnn_forward.1} parent=5 // pred_region
        %s348 = ssub.s32 %s25, 1
        // Predicated region
        $region13: #{mnist_gnn_forward.1} parent=11 // pred_check
          %p349 = pneg %p98
        $region14: #{mnist_gnn_forward.1} parent=11 // pred_check_branch
          %351 = sbr.rel (%p349) target = $region16
        $region15: #{mnist_gnn_forward.1} parent=11 // pred_region
          _
        $region16: #{mnist_gnn_forward.1} parent=11 // pred_fallthru
          _
        // Predicated region
        $region17: #{mnist_gnn_forward.1} parent=11 // pred_check
          %p352 = pneg %p119
        $region18: #{mnist_gnn_forward.1} parent=11 // pred_check_branch
          %354 = sbr.rel (%p352) target = $region20
        $region19: #{mnist_gnn_forward.1} parent=11 // pred_region
          _
        $region20: #{mnist_gnn_forward.1} parent=11 // pred_fallthru
          _
        // Predicated region
        $region21: #{mnist_gnn_forward.1} parent=11 // pred_check
          %p355 = pneg %p140
        $region22: #{mnist_gnn_forward.1} parent=11 // pred_check_branch
          %357 = sbr.rel (%p355) target = $region24
        $region23: #{mnist_gnn_forward.1} parent=11 // pred_region
          %359 = vsyncadd [#allocation3], 0
          %s360 = sshll.u32 %s4, 4
          %s361 = int_to_ptr.hbm [resolvable:$true] %s360
          %s362 = sshll.u32 [#allocation2], 4
          %s363 = int_to_ptr.vmem [resolvable:$true] %s362
          %368 = dma.hbm_to_vmem [thread:$0]  %s361, 2048, %s363, [#allocation3], 128, 128, 8
        $region24: #{mnist_gnn_forward.1} parent=11 // pred_fallthru
          _
        // Predicated region
        $region25: #{mnist_gnn_forward.1} parent=11 // pred_check
          %p369 = pneg %p161
        $region26: #{mnist_gnn_forward.1} parent=11 // pred_check_branch
          %371 = sbr.rel (%p369) target = $region28
        $region27: #{mnist_gnn_forward.1} parent=11 // pred_region
          _
        $region28: #{mnist_gnn_forward.1} parent=11 // pred_fallthru
          _
        // Predicated region
        $region29: #{mnist_gnn_forward.1} parent=11 // pred_check
          %p372 = pneg %p182
        $region30: #{mnist_gnn_forward.1} parent=11 // pred_check_branch
          %374 = sbr.rel (%p372) target = $region32
        $region31: #{mnist_gnn_forward.1} parent=11 // pred_region
          %376 = vsyncadd [#allocation6], 0
          %s377 = sshll.u32 %s6, 4
          %s378 = int_to_ptr.hbm [resolvable:$true] %s377
          %s379 = sshll.u32 [#allocation5], 4
          %s380 = int_to_ptr.vmem [resolvable:$true] %s379
          %385 = dma.hbm_to_vmem [thread:$0]  %s378, 2048, %s380, [#allocation6], 128, 128, 8
        $region32: #{mnist_gnn_forward.1} parent=11 // pred_fallthru
          _
        // Predicated region
        $region33: #{mnist_gnn_forward.1} parent=11 // pred_check
          %p386 = pneg %p203
        $region34: #{mnist_gnn_forward.1} parent=11 // pred_check_branch
          %388 = sbr.rel (%p386) target = $region36
        $region35: #{mnist_gnn_forward.1} parent=11 // pred_region
          _
        $region36: #{mnist_gnn_forward.1} parent=11 // pred_fallthru
          _
        // Predicated region
        $region37: #{mnist_gnn_forward.1} parent=11 // pred_check
          %p389 = pneg %p224
        $region38: #{mnist_gnn_forward.1} parent=11 // pred_check_branch
          %391 = sbr.rel (%p389) target = $region40
        $region39: #{mnist_gnn_forward.1} parent=11 // pred_region
          %393 = vsyncadd [#allocation6], 0
          %s394 = sshll.u32 %s8, 4
          %s395 = int_to_ptr.hbm [resolvable:$true] %s394
          %s396 = sshll.u32 [#allocation7], 4
          %s397 = int_to_ptr.vmem [resolvable:$true] %s396
          %402 = dma.hbm_to_vmem [thread:$0]  %s395, 2048, %s397, [#allocation6], 128, 128, 8
        $region40: #{mnist_gnn_forward.1} parent=11 // pred_fallthru
          _
        // Predicated region
        $region41: #{mnist_gnn_forward.1} parent=11 // pred_check
          %p403 = pneg %p245
        $region42: #{mnist_gnn_forward.1} parent=11 // pred_check_branch
          %405 = sbr.rel (%p403) target = $region44
        $region43: #{mnist_gnn_forward.1} parent=11 // pred_region
          %407 = vsyncadd [#allocation9], 0
          %s408 = sshll.u32 %s9, 4
          %s409 = int_to_ptr.hbm [resolvable:$true] %s408
          %s410 = sshll.u32 [#allocation8], 4
          %s411 = int_to_ptr.vmem [resolvable:$true] %s410
          %416 = dma.hbm_to_vmem [thread:$0]  %s409, 2048, %s411, [#allocation9], 128, 128, 8
        $region44: #{mnist_gnn_forward.1} parent=11 // pred_fallthru
          _
        // Predicated region
        $region45: #{mnist_gnn_forward.1} parent=11 // pred_check
          %p417 = pneg %p266
        $region46: #{mnist_gnn_forward.1} parent=11 // pred_check_branch
          %419 = sbr.rel (%p417) target = $region48
        $region47: #{mnist_gnn_forward.1} parent=11 // pred_region
          _
        $region48: #{mnist_gnn_forward.1} parent=11 // pred_fallthru
          _
        // Predicated region
        $region49: #{mnist_gnn_forward.1} parent=11 // pred_check
          %p420 = pneg %p287
        $region50: #{mnist_gnn_forward.1} parent=11 // pred_check_branch
          %422 = sbr.rel (%p420) target = $region52
        $region51: #{mnist_gnn_forward.1} parent=11 // pred_region
          %424 = vsyncadd [#allocation9], 0
          %s425 = sshll.u32 %s11, 4
          %s426 = int_to_ptr.hbm [resolvable:$true] %s425
          %s427 = sshll.u32 [#allocation10], 4
          %s428 = int_to_ptr.vmem [resolvable:$true] %s427
          %433 = dma.hbm_to_vmem [thread:$0]  %s426, 2048, %s428, [#allocation9], 128, 128, 8
        $region52: #{mnist_gnn_forward.1} parent=11 // pred_fallthru
          _
        // Predicated region
        $region53: #{mnist_gnn_forward.1} parent=11 // pred_check
          %p434 = pneg %p308
        $region54: #{mnist_gnn_forward.1} parent=11 // pred_check_branch
          %436 = sbr.rel (%p434) target = $region56
        $region55: #{mnist_gnn_forward.1} parent=11 // pred_region
          _
        $region56: #{mnist_gnn_forward.1} parent=11 // pred_fallthru
          _
      $region12: #{mnist_gnn_forward.1} parent=5 // pred_fallthru
        _
      %p437 = scmp.lt.s32.totalorder %s25, 2
      // Predicated region
      $region57: #{mnist_gnn_forward.1} parent=5 // pred_check
        %p438 = pneg %p437
      $region58: #{mnist_gnn_forward.1} parent=5 // pred_check_branch
        %440 = sbr.rel (%p438) target = $region60
      $region59: #{mnist_gnn_forward.1} parent=5 // pred_region
        // Predicated region
        $region61: #{mnist_gnn_forward.1} parent=59 // pred_check
          %p441 = pneg %p45
        $region62: #{mnist_gnn_forward.1} parent=59 // pred_check_branch
          %443 = sbr.rel (%p441) target = $region64
        $region63: #{mnist_gnn_forward.1} parent=59 // pred_region
          %s444 = smul.u32 8, %s25
          %p445 = scmp.lt.s32.totalorder %s444, 15
          %s446 = scalar_select %p445, %s444, 15
          %s447 = smul.addr %s446, 2
          %s448 = smul.addr %s447, 8
          %s449 = scalar_lea.vmem %s0, %s448
          %s450 = smul.u32 8, %s25
        $region64: #{mnist_gnn_forward.1} parent=59 // pred_fallthru
          _
        // Predicated region
        $region65: #{mnist_gnn_forward.1} parent=59 // pred_check
          %p451 = pneg %p71
        $region66: #{mnist_gnn_forward.1} parent=59 // pred_check_branch
          %453 = sbr.rel (%p451) target = $region68
        $region67: #{mnist_gnn_forward.1} parent=59 // pred_region
          %s454 = smul.u32 16, %s25
          %p455 = scmp.lt.s32.totalorder %s454, 31
          %s456 = scalar_select %p455, %s454, 31
          %s457 = smul.addr %s456, 8
          %s458 = scalar_lea.vmem %s1, %s457
          %s459 = smul.u32 16, %s25
        $region68: #{mnist_gnn_forward.1} parent=59 // pred_fallthru
          _
      $region60: #{mnist_gnn_forward.1} parent=5 // pred_fallthru
        _
      %p460 = scmp.le.s32.totalorder 1, %s25
      %p461 = scmp.lt.s32.totalorder %s25, 3
      %p462 = pnand %p460, %p461
      %p463 = pneg %p462
      // Predicated region
      $region69: #{mnist_gnn_forward.1} parent=5 // pred_check
        _
      $region70: #{mnist_gnn_forward.1} parent=5 // pred_check_branch
        %465 = sbr.rel (%p462) target = $region72
      $region71: #{mnist_gnn_forward.1} parent=5 // pred_region
        %s466 = ssub.s32 %s25, 1
        // Predicated region
        $region73: #{mnist_gnn_forward.1} parent=71 // pred_check
          %p467 = pneg %p140
        $region74: #{mnist_gnn_forward.1} parent=71 // pred_check_branch
          %469 = sbr.rel (%p467) target = $region76
        $region75: #{mnist_gnn_forward.1} parent=71 // pred_region
          %471 = dma.done [#allocation3], 2048
        $region76: #{mnist_gnn_forward.1} parent=71 // pred_fallthru
          _
        // Predicated region
        $region77: #{mnist_gnn_forward.1} parent=71 // pred_check
          %p472 = pneg %p182
        $region78: #{mnist_gnn_forward.1} parent=71 // pred_check_branch
          %474 = sbr.rel (%p472) target = $region80
        $region79: #{mnist_gnn_forward.1} parent=71 // pred_region
          %476 = dma.done [#allocation6], 2048
        $region80: #{mnist_gnn_forward.1} parent=71 // pred_fallthru
          _
        // Predicated region
        $region81: #{mnist_gnn_forward.1} parent=71 // pred_check
          %p477 = pneg %p224
        $region82: #{mnist_gnn_forward.1} parent=71 // pred_check_branch
          %479 = sbr.rel (%p477) target = $region84
        $region83: #{mnist_gnn_forward.1} parent=71 // pred_region
          %481 = dma.done [#allocation6], 2048
        $region84: #{mnist_gnn_forward.1} parent=71 // pred_fallthru
          _
        // Predicated region
        $region85: #{mnist_gnn_forward.1} parent=71 // pred_check
          %p482 = pneg %p245
        $region86: #{mnist_gnn_forward.1} parent=71 // pred_check_branch
          %484 = sbr.rel (%p482) target = $region88
        $region87: #{mnist_gnn_forward.1} parent=71 // pred_region
          %486 = dma.done [#allocation9], 2048
        $region88: #{mnist_gnn_forward.1} parent=71 // pred_fallthru
          _
        // Predicated region
        $region89: #{mnist_gnn_forward.1} parent=71 // pred_check
          %p487 = pneg %p287
        $region90: #{mnist_gnn_forward.1} parent=71 // pred_check_branch
          %489 = sbr.rel (%p487) target = $region92
        $region91: #{mnist_gnn_forward.1} parent=71 // pred_region
          %491 = dma.done [#allocation9], 2048
        $region92: #{mnist_gnn_forward.1} parent=71 // pred_fallthru
          _
        %s492 = smul.u32 8, %s30
        %p493 = scmp.lt.s32.totalorder %s492, 15
        %s494 = scalar_select %p493, %s492, 15
        %s495 = smul.addr %s494, 2
        %s496 = smul.addr %s495, 8
        %s497 = scalar_lea.vmem %s0, %s496
        %p498 = pneg %p51
        %p499 = pneg %p48
        %s500 = smul.u32 16, %s30
        %p501 = scmp.lt.s32.totalorder %s500, 31
        %s502 = scalar_select %p501, %s500, 31
        %s503 = smul.addr %s502, 8
        %s504 = scalar_lea.vmem %s1, %s503
        %p505 = pneg %p77
        %p506 = pneg %p74
        %p507 = pneg %p98
        %p508 = pneg %p95
        %p509 = pneg %p119
        %p510 = pneg %p116
        %p511 = pneg %p140
        %p512 = pneg %p137
        %p513 = pneg %p161
        %p514 = pneg %p158
        %p515 = pneg %p182
        %p516 = pneg %p179
        %p517 = pneg %p203
        %p518 = pneg %p200
        %p519 = pneg %p224
        %p520 = pneg %p221
        %p521 = pneg %p245
        %p522 = pneg %p242
        %p523 = pneg %p266
        %p524 = pneg %p263
        %p525 = pneg %p287
        %p526 = pneg %p284
        %p527 = pneg %p308
        %p528 = pneg %p305
        %p529 = pneg %p334
        %p530 = pneg %p331
        %s531 = sand.u32 %s321, 1
        %s532 = scalar_lea.sflag [#allocation4], %s531
        %s533 = sand.u32 %s321, 1
        %s534 = smul.addr %s533, 8
        %s535 = scalar_lea.vmem [#allocation11], %s534
        %s536 = smul.u32 8, %s30
        %p537 = scmp.lt.s32.totalorder %s536, 15
        %s538 = scalar_select %p537, %s536, 15
        %s539 = smul.addr %s538, 2
        %s540 = smul.addr %s539, 8
        %s541 = scalar_lea.vmem %s0, %s540
        %s542 = smul.u32 8, %s30
        %s543 = smul.u32 16, %s30
        %p544 = scmp.lt.s32.totalorder %s543, 31
        %s545 = scalar_select %p544, %s543, 31
        %s546 = smul.addr %s545, 8
        %s547 = scalar_lea.vmem %s1, %s546
        %s548 = smul.u32 16, %s30
        %v549 = vld [vmem:[%s541] sm:$0xff]
        %v550 = vld [vmem:[%s541 + $0x8] sm:$0xff]
        %v551 = vld [vmem:[%s541 + $0x10] sm:$0xff]
        %v552 = vld [vmem:[%s541 + $0x18] sm:$0xff]
        %v553 = vld [vmem:[%s541 + $0x20] sm:$0xff]
        %v554 = vld [vmem:[%s541 + $0x28] sm:$0xff]
        %v555 = vld [vmem:[%s541 + $0x30] sm:$0xff]
        %v556 = vld [vmem:[%s541 + $0x38] sm:$0xff]
        %v557 = vld [vmem:[%s541 + $0x40] sm:$0xff]
        %v558 = vld [vmem:[%s541 + $0x48] sm:$0xff]
        %v559 = vld [vmem:[%s541 + $0x50] sm:$0xff]
        %v560 = vld [vmem:[%s541 + $0x58] sm:$0xff]
        %v561 = vld [vmem:[%s541 + $0x60] sm:$0xff]
        %v562 = vld [vmem:[%s541 + $0x68] sm:$0xff]
        %v563 = vld [vmem:[%s541 + $0x70] sm:$0xff]
        %v564 = vld [vmem:[%s541 + $0x78] sm:$0xff]
        %v565 = vld [vmem:[%s547] sm:$0xff]
        %v566 = vld [vmem:[%s547 + $0x8] sm:$0xff]
        %v567 = vld [vmem:[%s547 + $0x10] sm:$0xff]
        %v568 = vld [vmem:[%s547 + $0x18] sm:$0xff]
        %v569 = vld [vmem:[%s547 + $0x20] sm:$0xff]
        %v570 = vld [vmem:[%s547 + $0x28] sm:$0xff]
        %v571 = vld [vmem:[%s547 + $0x30] sm:$0xff]
        %v572 = vld [vmem:[%s547 + $0x38] sm:$0xff]
        %v573 = vld [vmem:[%s547 + $0x40] sm:$0xff]
        %v574 = vld [vmem:[%s547 + $0x48] sm:$0xff]
        %v575 = vld [vmem:[%s547 + $0x50] sm:$0xff]
        %v576 = vld [vmem:[%s547 + $0x58] sm:$0xff]
        %v577 = vld [vmem:[%s547 + $0x60] sm:$0xff]
        %v578 = vld [vmem:[%s547 + $0x68] sm:$0xff]
        %v579 = vld [vmem:[%s547 + $0x70] sm:$0xff]
        %v580 = vld [vmem:[%s547 + $0x78] sm:$0xff]
        %v581 = vld [vmem:[%s2] sm:$0xff]
        %vm582 = vcmask 64512
        %v584 = vsel %vm582, %v565, 0
        %v587 = vsel %vm582, %v566, 0
        %v590 = vsel %vm582, %v567, 0
        %v593 = vsel %vm582, %v568, 0
        %v596 = vsel %vm582, %v569, 0
        %v599 = vsel %vm582, %v570, 0
        %v602 = vsel %vm582, %v571, 0
        %v605 = vsel %vm582, %v572, 0
        %v608 = vsel %vm582, %v573, 0
        %v611 = vsel %vm582, %v574, 0
        %v614 = vsel %vm582, %v575, 0
        %v617 = vsel %vm582, %v576, 0
        %v620 = vsel %vm582, %v577, 0
        %v623 = vsel %vm582, %v578, 0
        %v626 = vsel %vm582, %v579, 0
        %v629 = vsel %vm582, %v580, 0
        %631 = vmatpush.msra.mxu0 0.0
        %632 = vmatpush.msra.mxu0 0.0
        %633 = vmatpush.msra.mxu0 0.0
        %634 = vmatpush.msra.mxu0 0.0
        %635 = vmatpush.msra.mxu0 0.0
        %636 = vmatpush.msra.mxu0 0.0
        %637 = vmatpush.msra.mxu0 0.0
        %638 = vmatpush.msra.mxu0 0.0
        %639 = vmatpush.msra.mxu0 0.0
        %640 = vmatpush.msra.mxu0 0.0
        %641 = vmatpush.msra.mxu0 0.0
        %642 = vmatpush.msra.mxu0 0.0
        %643 = vmatpush.msra.mxu0 0.0
        %644 = vmatpush.msra.mxu0 0.0
        %645 = vmatpush.msra.mxu0 0.0
        %646 = vmatpush.msra.mxu0 %v581
        %647 = vmatmul.f32.gmra.mxu0 %v584
        %v648 = vpop.f32.mrf.mxu0
        %v649 = vadd.f32 0.0, %v648
        %650 = vmatmul.f32.gmra.mxu0 %v587
        %v651 = vpop.f32.mrf.mxu0
        %v652 = vadd.f32 0.0, %v651
        %653 = vmatmul.f32.gmra.mxu0 %v590
        %v654 = vpop.f32.mrf.mxu0
        %v655 = vadd.f32 0.0, %v654
        %656 = vmatmul.f32.gmra.mxu0 %v593
        %v657 = vpop.f32.mrf.mxu0
        %v658 = vadd.f32 0.0, %v657
        %659 = vmatmul.f32.gmra.mxu0 %v596
        %v660 = vpop.f32.mrf.mxu0
        %v661 = vadd.f32 0.0, %v660
        %662 = vmatmul.f32.gmra.mxu0 %v599
        %v663 = vpop.f32.mrf.mxu0
        %v664 = vadd.f32 0.0, %v663
        %665 = vmatmul.f32.gmra.mxu0 %v602
        %v666 = vpop.f32.mrf.mxu0
        %v667 = vadd.f32 0.0, %v666
        %668 = vmatmul.f32.gmra.mxu0 %v605
        %v669 = vpop.f32.mrf.mxu0
        %v670 = vadd.f32 0.0, %v669
        %671 = vmatmul.f32.gmra.mxu0 %v608
        %v672 = vpop.f32.mrf.mxu0
        %v673 = vadd.f32 0.0, %v672
        %674 = vmatmul.f32.gmra.mxu0 %v611
        %v675 = vpop.f32.mrf.mxu0
        %v676 = vadd.f32 0.0, %v675
        %677 = vmatmul.f32.gmra.mxu0 %v614
        %v678 = vpop.f32.mrf.mxu0
        %v679 = vadd.f32 0.0, %v678
        %680 = vmatmul.f32.gmra.mxu0 %v617
        %v681 = vpop.f32.mrf.mxu0
        %v682 = vadd.f32 0.0, %v681
        %683 = vmatmul.f32.gmra.mxu0 %v620
        %v684 = vpop.f32.mrf.mxu0
        %v685 = vadd.f32 0.0, %v684
        %686 = vmatmul.f32.gmra.mxu0 %v623
        %v687 = vpop.f32.mrf.mxu0
        %v688 = vadd.f32 0.0, %v687
        %689 = vmatmul.f32.gmra.mxu0 %v626
        %v690 = vpop.f32.mrf.mxu0
        %v691 = vadd.f32 0.0, %v690
        %692 = vmatmul.f32.gmra.mxu0 %v629
        %v693 = vpop.f32.mrf.mxu0
        %v694 = vadd.f32 0.0, %v693
        %695 = vdwg.mxu0
        %vm696 = vcmask 130048
        %v698 = vsel %vm696, %v549, 0
        %v701 = vsel %vm696, %v550, 0
        %703 = vmatpush.msra.mxu0 0.0
        %704 = vmatpush.msra.mxu0 0.0
        %705 = vmatpush.msra.mxu0 0.0
        %706 = vmatpush.msra.mxu0 0.0
        %707 = vmatpush.msra.mxu0 0.0
        %708 = vmatpush.msra.mxu0 0.0
        %709 = vmatpush.msra.mxu0 0.0
        %710 = vmatpush.msra.mxu0 0.0
        %711 = vmatpush.msra.mxu0 0.0
        %712 = vmatpush.msra.mxu0 0.0
        %713 = vmatpush.msra.mxu0 0.0
        %714 = vmatpush.msra.mxu0 0.0
        %715 = vmatpush.msra.mxu0 0.0
        %716 = vmatpush.msra.mxu0 0.0
        %717 = vmatpush.msra.mxu0 %v652
        %718 = vmatpush.msra.mxu0 %v649
        %719 = vmatmul.f32.gmra.mxu0 %v698
        %v720 = vpop.f32.mrf.mxu0
        %v721 = vadd.f32 0.0, %v720
        %722 = vmatmul.f32.gmra.mxu0 %v701
        %v723 = vpop.f32.mrf.mxu0
        %v724 = vadd.f32 0.0, %v723
        %725 = vdwg.mxu0
        %v727 = vsel %vm696, %v551, 0
        %v730 = vsel %vm696, %v552, 0
        %732 = vmatpush.msra.mxu0 0.0
        %733 = vmatpush.msra.mxu0 0.0
        %734 = vmatpush.msra.mxu0 0.0
        %735 = vmatpush.msra.mxu0 0.0
        %736 = vmatpush.msra.mxu0 0.0
        %737 = vmatpush.msra.mxu0 0.0
        %738 = vmatpush.msra.mxu0 0.0
        %739 = vmatpush.msra.mxu0 0.0
        %740 = vmatpush.msra.mxu0 0.0
        %741 = vmatpush.msra.mxu0 0.0
        %742 = vmatpush.msra.mxu0 0.0
        %743 = vmatpush.msra.mxu0 0.0
        %744 = vmatpush.msra.mxu0 0.0
        %745 = vmatpush.msra.mxu0 0.0
        %746 = vmatpush.msra.mxu0 %v658
        %747 = vmatpush.msra.mxu0 %v655
        %748 = vmatmul.f32.gmra.mxu0 %v727
        %v749 = vpop.f32.mrf.mxu0
        %v750 = vadd.f32 0.0, %v749
        %751 = vmatmul.f32.gmra.mxu0 %v730
        %v752 = vpop.f32.mrf.mxu0
        %v753 = vadd.f32 0.0, %v752
        %754 = vdwg.mxu0
        %v756 = vsel %vm696, %v553, 0
        %v759 = vsel %vm696, %v554, 0
        %761 = vmatpush.msra.mxu0 0.0
        %762 = vmatpush.msra.mxu0 0.0
        %763 = vmatpush.msra.mxu0 0.0
        %764 = vmatpush.msra.mxu0 0.0
        %765 = vmatpush.msra.mxu0 0.0
        %766 = vmatpush.msra.mxu0 0.0
        %767 = vmatpush.msra.mxu0 0.0
        %768 = vmatpush.msra.mxu0 0.0
        %769 = vmatpush.msra.mxu0 0.0
        %770 = vmatpush.msra.mxu0 0.0
        %771 = vmatpush.msra.mxu0 0.0
        %772 = vmatpush.msra.mxu0 0.0
        %773 = vmatpush.msra.mxu0 0.0
        %774 = vmatpush.msra.mxu0 0.0
        %775 = vmatpush.msra.mxu0 %v664
        %776 = vmatpush.msra.mxu0 %v661
        %777 = vmatmul.f32.gmra.mxu0 %v756
        %v778 = vpop.f32.mrf.mxu0
        %v779 = vadd.f32 0.0, %v778
        %780 = vmatmul.f32.gmra.mxu0 %v759
        %v781 = vpop.f32.mrf.mxu0
        %v782 = vadd.f32 0.0, %v781
        %783 = vdwg.mxu0
        %v785 = vsel %vm696, %v555, 0
        %v788 = vsel %vm696, %v556, 0
        %790 = vmatpush.msra.mxu0 0.0
        %791 = vmatpush.msra.mxu0 0.0
        %792 = vmatpush.msra.mxu0 0.0
        %793 = vmatpush.msra.mxu0 0.0
        %794 = vmatpush.msra.mxu0 0.0
        %795 = vmatpush.msra.mxu0 0.0
        %796 = vmatpush.msra.mxu0 0.0
        %797 = vmatpush.msra.mxu0 0.0
        %798 = vmatpush.msra.mxu0 0.0
        %799 = vmatpush.msra.mxu0 0.0
        %800 = vmatpush.msra.mxu0 0.0
        %801 = vmatpush.msra.mxu0 0.0
        %802 = vmatpush.msra.mxu0 0.0
        %803 = vmatpush.msra.mxu0 0.0
        %804 = vmatpush.msra.mxu0 %v670
        %805 = vmatpush.msra.mxu0 %v667
        %806 = vmatmul.f32.gmra.mxu0 %v785
        %v807 = vpop.f32.mrf.mxu0
        %v808 = vadd.f32 0.0, %v807
        %809 = vmatmul.f32.gmra.mxu0 %v788
        %v810 = vpop.f32.mrf.mxu0
        %v811 = vadd.f32 0.0, %v810
        %812 = vdwg.mxu0
        %v814 = vsel %vm696, %v557, 0
        %v817 = vsel %vm696, %v558, 0
        %819 = vmatpush.msra.mxu0 0.0
        %820 = vmatpush.msra.mxu0 0.0
        %821 = vmatpush.msra.mxu0 0.0
        %822 = vmatpush.msra.mxu0 0.0
        %823 = vmatpush.msra.mxu0 0.0
        %824 = vmatpush.msra.mxu0 0.0
        %825 = vmatpush.msra.mxu0 0.0
        %826 = vmatpush.msra.mxu0 0.0
        %827 = vmatpush.msra.mxu0 0.0
        %828 = vmatpush.msra.mxu0 0.0
        %829 = vmatpush.msra.mxu0 0.0
        %830 = vmatpush.msra.mxu0 0.0
        %831 = vmatpush.msra.mxu0 0.0
        %832 = vmatpush.msra.mxu0 0.0
        %833 = vmatpush.msra.mxu0 %v676
        %834 = vmatpush.msra.mxu0 %v673
        %835 = vmatmul.f32.gmra.mxu0 %v814
        %v836 = vpop.f32.mrf.mxu0
        %v837 = vadd.f32 0.0, %v836
        %838 = vmatmul.f32.gmra.mxu0 %v817
        %v839 = vpop.f32.mrf.mxu0
        %v840 = vadd.f32 0.0, %v839
        %841 = vdwg.mxu0
        %v843 = vsel %vm696, %v559, 0
        %v846 = vsel %vm696, %v560, 0
        %848 = vmatpush.msra.mxu0 0.0
        %849 = vmatpush.msra.mxu0 0.0
        %850 = vmatpush.msra.mxu0 0.0
        %851 = vmatpush.msra.mxu0 0.0
        %852 = vmatpush.msra.mxu0 0.0
        %853 = vmatpush.msra.mxu0 0.0
        %854 = vmatpush.msra.mxu0 0.0
        %855 = vmatpush.msra.mxu0 0.0
        %856 = vmatpush.msra.mxu0 0.0
        %857 = vmatpush.msra.mxu0 0.0
        %858 = vmatpush.msra.mxu0 0.0
        %859 = vmatpush.msra.mxu0 0.0
        %860 = vmatpush.msra.mxu0 0.0
        %861 = vmatpush.msra.mxu0 0.0
        %862 = vmatpush.msra.mxu0 %v682
        %863 = vmatpush.msra.mxu0 %v679
        %864 = vmatmul.f32.gmra.mxu0 %v843
        %v865 = vpop.f32.mrf.mxu0
        %v866 = vadd.f32 0.0, %v865
        %867 = vmatmul.f32.gmra.mxu0 %v846
        %v868 = vpop.f32.mrf.mxu0
        %v869 = vadd.f32 0.0, %v868
        %870 = vdwg.mxu0
        %v872 = vsel %vm696, %v561, 0
        %v875 = vsel %vm696, %v562, 0
        %877 = vmatpush.msra.mxu0 0.0
        %878 = vmatpush.msra.mxu0 0.0
        %879 = vmatpush.msra.mxu0 0.0
        %880 = vmatpush.msra.mxu0 0.0
        %881 = vmatpush.msra.mxu0 0.0
        %882 = vmatpush.msra.mxu0 0.0
        %883 = vmatpush.msra.mxu0 0.0
        %884 = vmatpush.msra.mxu0 0.0
        %885 = vmatpush.msra.mxu0 0.0
        %886 = vmatpush.msra.mxu0 0.0
        %887 = vmatpush.msra.mxu0 0.0
        %888 = vmatpush.msra.mxu0 0.0
        %889 = vmatpush.msra.mxu0 0.0
        %890 = vmatpush.msra.mxu0 0.0
        %891 = vmatpush.msra.mxu0 %v688
        %892 = vmatpush.msra.mxu0 %v685
        %893 = vmatmul.f32.gmra.mxu0 %v872
        %v894 = vpop.f32.mrf.mxu0
        %v895 = vadd.f32 0.0, %v894
        %896 = vmatmul.f32.gmra.mxu0 %v875
        %v897 = vpop.f32.mrf.mxu0
        %v898 = vadd.f32 0.0, %v897
        %899 = vdwg.mxu0
        %v901 = vsel %vm696, %v563, 0
        %v904 = vsel %vm696, %v564, 0
        %906 = vmatpush.msra.mxu0 0.0
        %907 = vmatpush.msra.mxu0 0.0
        %908 = vmatpush.msra.mxu0 0.0
        %909 = vmatpush.msra.mxu0 0.0
        %910 = vmatpush.msra.mxu0 0.0
        %911 = vmatpush.msra.mxu0 0.0
        %912 = vmatpush.msra.mxu0 0.0
        %913 = vmatpush.msra.mxu0 0.0
        %914 = vmatpush.msra.mxu0 0.0
        %915 = vmatpush.msra.mxu0 0.0
        %916 = vmatpush.msra.mxu0 0.0
        %917 = vmatpush.msra.mxu0 0.0
        %918 = vmatpush.msra.mxu0 0.0
        %919 = vmatpush.msra.mxu0 0.0
        %920 = vmatpush.msra.mxu0 %v694
        %921 = vmatpush.msra.mxu0 %v691
        %922 = vmatmul.f32.gmra.mxu0 %v901
        %v923 = vpop.f32.mrf.mxu0
        %v924 = vadd.f32 0.0, %v923
        %925 = vmatmul.f32.gmra.mxu0 %v904
        %v926 = vpop.f32.mrf.mxu0
        %v927 = vadd.f32 0.0, %v926
        %928 = vdwg.mxu0
        %v929 = vld [vmem:[%s3] sm:$0x1]
        %v931 = vperm.slane %v929, 0
        %v933 = vadd.f32 %v721, %v931
        %v934 = vadd.f32 %v724, %v931
        %v935 = vadd.f32 %v750, %v931
        %v936 = vadd.f32 %v753, %v931
        %v937 = vadd.f32 %v779, %v931
        %v938 = vadd.f32 %v782, %v931
        %v939 = vadd.f32 %v808, %v931
        %v940 = vadd.f32 %v811, %v931
        %v941 = vadd.f32 %v837, %v931
        %v942 = vadd.f32 %v840, %v931
        %v943 = vadd.f32 %v866, %v931
        %v944 = vadd.f32 %v869, %v931
        %v945 = vadd.f32 %v895, %v931
        %v946 = vadd.f32 %v898, %v931
        %v947 = vadd.f32 %v924, %v931
        %v948 = vadd.f32 %v927, %v931
        %v949 = vmax.f32 %v933, 0.0
        %v950 = vmax.f32 %v934, 0.0
        %v951 = vmax.f32 %v935, 0.0
        %v952 = vmax.f32 %v936, 0.0
        %v953 = vmax.f32 %v937, 0.0
        %v954 = vmax.f32 %v938, 0.0
        %v955 = vmax.f32 %v939, 0.0
        %v956 = vmax.f32 %v940, 0.0
        %v957 = vmax.f32 %v941, 0.0
        %v958 = vmax.f32 %v942, 0.0
        %v959 = vmax.f32 %v943, 0.0
        %v960 = vmax.f32 %v944, 0.0
        %v961 = vmax.f32 %v945, 0.0
        %v962 = vmax.f32 %v946, 0.0
        %v963 = vmax.f32 %v947, 0.0
        %v964 = vmax.f32 %v948, 0.0
        %v965 = vld [vmem:[#allocation2] sm:$0xff]
        %v966 = vld [vmem:[#allocation2 + $0x8] sm:$0xff]
        %v967 = vld [vmem:[#allocation2 + $0x10] sm:$0xff]
        %v968 = vld [vmem:[#allocation2 + $0x18] sm:$0xff]
        %v969 = vld [vmem:[#allocation2 + $0x20] sm:$0xff]
        %v970 = vld [vmem:[#allocation2 + $0x28] sm:$0xff]
        %v971 = vld [vmem:[#allocation2 + $0x30] sm:$0xff]
        %v972 = vld [vmem:[#allocation2 + $0x38] sm:$0xff]
        %v973 = vld [vmem:[#allocation2 + $0x40] sm:$0xff]
        %v974 = vld [vmem:[#allocation2 + $0x48] sm:$0xff]
        %v975 = vld [vmem:[#allocation2 + $0x50] sm:$0xff]
        %v976 = vld [vmem:[#allocation2 + $0x58] sm:$0xff]
        %v977 = vld [vmem:[#allocation2 + $0x60] sm:$0xff]
        %v978 = vld [vmem:[#allocation2 + $0x68] sm:$0xff]
        %v979 = vld [vmem:[#allocation2 + $0x70] sm:$0xff]
        %v980 = vld [vmem:[#allocation2 + $0x78] sm:$0xff]
        %981 = vmatpush.msra.mxu0 %v980
        %982 = vmatpush.msra.mxu0 %v979
        %983 = vmatpush.msra.mxu0 %v978
        %984 = vmatpush.msra.mxu0 %v977
        %985 = vmatpush.msra.mxu0 %v976
        %986 = vmatpush.msra.mxu0 %v975
        %987 = vmatpush.msra.mxu0 %v974
        %988 = vmatpush.msra.mxu0 %v973
        %989 = vmatpush.msra.mxu0 %v972
        %990 = vmatpush.msra.mxu0 %v971
        %991 = vmatpush.msra.mxu0 %v970
        %992 = vmatpush.msra.mxu0 %v969
        %993 = vmatpush.msra.mxu0 %v968
        %994 = vmatpush.msra.mxu0 %v967
        %995 = vmatpush.msra.mxu0 %v966
        %996 = vmatpush.msra.mxu0 %v965
        %997 = vmatmul.f32.gmra.mxu0 %v949
        %v998 = vpop.f32.mrf.mxu0
        %v999 = vadd.f32 0.0, %v998
        %1000 = vmatmul.f32.gmra.mxu0 %v950
        %v1001 = vpop.f32.mrf.mxu0
        %v1002 = vadd.f32 0.0, %v1001
        %1003 = vmatmul.f32.gmra.mxu0 %v951
        %v1004 = vpop.f32.mrf.mxu0
        %v1005 = vadd.f32 0.0, %v1004
        %1006 = vmatmul.f32.gmra.mxu0 %v952
        %v1007 = vpop.f32.mrf.mxu0
        %v1008 = vadd.f32 0.0, %v1007
        %1009 = vmatmul.f32.gmra.mxu0 %v953
        %v1010 = vpop.f32.mrf.mxu0
        %v1011 = vadd.f32 0.0, %v1010
        %1012 = vmatmul.f32.gmra.mxu0 %v954
        %v1013 = vpop.f32.mrf.mxu0
        %v1014 = vadd.f32 0.0, %v1013
        %1015 = vmatmul.f32.gmra.mxu0 %v955
        %v1016 = vpop.f32.mrf.mxu0
        %v1017 = vadd.f32 0.0, %v1016
        %1018 = vmatmul.f32.gmra.mxu0 %v956
        %v1019 = vpop.f32.mrf.mxu0
        %v1020 = vadd.f32 0.0, %v1019
        %1021 = vmatmul.f32.gmra.mxu0 %v957
        %v1022 = vpop.f32.mrf.mxu0
        %v1023 = vadd.f32 0.0, %v1022
        %1024 = vmatmul.f32.gmra.mxu0 %v958
        %v1025 = vpop.f32.mrf.mxu0
        %v1026 = vadd.f32 0.0, %v1025
        %1027 = vmatmul.f32.gmra.mxu0 %v959
        %v1028 = vpop.f32.mrf.mxu0
        %v1029 = vadd.f32 0.0, %v1028
        %1030 = vmatmul.f32.gmra.mxu0 %v960
        %v1031 = vpop.f32.mrf.mxu0
        %v1032 = vadd.f32 0.0, %v1031
        %1033 = vmatmul.f32.gmra.mxu0 %v961
        %v1034 = vpop.f32.mrf.mxu0
        %v1035 = vadd.f32 0.0, %v1034
        %1036 = vmatmul.f32.gmra.mxu0 %v962
        %v1037 = vpop.f32.mrf.mxu0
        %v1038 = vadd.f32 0.0, %v1037
        %1039 = vmatmul.f32.gmra.mxu0 %v963
        %v1040 = vpop.f32.mrf.mxu0
        %v1041 = vadd.f32 0.0, %v1040
        %1042 = vmatmul.f32.gmra.mxu0 %v964
        %v1043 = vpop.f32.mrf.mxu0
        %v1044 = vadd.f32 0.0, %v1043
        %1045 = vdwg.mxu0
        %1046 = vmatpush.msra.mxu0 0.0
        %1047 = vmatpush.msra.mxu0 0.0
        %1048 = vmatpush.msra.mxu0 0.0
        %1049 = vmatpush.msra.mxu0 0.0
        %1050 = vmatpush.msra.mxu0 0.0
        %1051 = vmatpush.msra.mxu0 0.0
        %1052 = vmatpush.msra.mxu0 0.0
        %1053 = vmatpush.msra.mxu0 0.0
        %1054 = vmatpush.msra.mxu0 0.0
        %1055 = vmatpush.msra.mxu0 0.0
        %1056 = vmatpush.msra.mxu0 0.0
        %1057 = vmatpush.msra.mxu0 0.0
        %1058 = vmatpush.msra.mxu0 0.0
        %1059 = vmatpush.msra.mxu0 0.0
        %1060 = vmatpush.msra.mxu0 %v1002
        %1061 = vmatpush.msra.mxu0 %v999
        %1062 = vmatmul.f32.gmra.mxu0 %v698
        %v1063 = vpop.f32.mrf.mxu0
        %v1064 = vadd.f32 0.0, %v1063
        %1065 = vmatmul.f32.gmra.mxu0 %v701
        %v1066 = vpop.f32.mrf.mxu0
        %v1067 = vadd.f32 0.0, %v1066
        %1068 = vdwg.mxu0
        %1069 = vmatpush.msra.mxu0 0.0
        %1070 = vmatpush.msra.mxu0 0.0
        %1071 = vmatpush.msra.mxu0 0.0
        %1072 = vmatpush.msra.mxu0 0.0
        %1073 = vmatpush.msra.mxu0 0.0
        %1074 = vmatpush.msra.mxu0 0.0
        %1075 = vmatpush.msra.mxu0 0.0
        %1076 = vmatpush.msra.mxu0 0.0
        %1077 = vmatpush.msra.mxu0 0.0
        %1078 = vmatpush.msra.mxu0 0.0
        %1079 = vmatpush.msra.mxu0 0.0
        %1080 = vmatpush.msra.mxu0 0.0
        %1081 = vmatpush.msra.mxu0 0.0
        %1082 = vmatpush.msra.mxu0 0.0
        %1083 = vmatpush.msra.mxu0 %v1008
        %1084 = vmatpush.msra.mxu0 %v1005
        %1085 = vmatmul.f32.gmra.mxu0 %v727
        %v1086 = vpop.f32.mrf.mxu0
        %v1087 = vadd.f32 0.0, %v1086
        %1088 = vmatmul.f32.gmra.mxu0 %v730
        %v1089 = vpop.f32.mrf.mxu0
        %v1090 = vadd.f32 0.0, %v1089
        %1091 = vdwg.mxu0
        %1092 = vmatpush.msra.mxu0 0.0
        %1093 = vmatpush.msra.mxu0 0.0
        %1094 = vmatpush.msra.mxu0 0.0
        %1095 = vmatpush.msra.mxu0 0.0
        %1096 = vmatpush.msra.mxu0 0.0
        %1097 = vmatpush.msra.mxu0 0.0
        %1098 = vmatpush.msra.mxu0 0.0
        %1099 = vmatpush.msra.mxu0 0.0
        %1100 = vmatpush.msra.mxu0 0.0
        %1101 = vmatpush.msra.mxu0 0.0
        %1102 = vmatpush.msra.mxu0 0.0
        %1103 = vmatpush.msra.mxu0 0.0
        %1104 = vmatpush.msra.mxu0 0.0
        %1105 = vmatpush.msra.mxu0 0.0
        %1106 = vmatpush.msra.mxu0 %v1014
        %1107 = vmatpush.msra.mxu0 %v1011
        %1108 = vmatmul.f32.gmra.mxu0 %v756
        %v1109 = vpop.f32.mrf.mxu0
        %v1110 = vadd.f32 0.0, %v1109
        %1111 = vmatmul.f32.gmra.mxu0 %v759
        %v1112 = vpop.f32.mrf.mxu0
        %v1113 = vadd.f32 0.0, %v1112
        %1114 = vdwg.mxu0
        %1115 = vmatpush.msra.mxu0 0.0
        %1116 = vmatpush.msra.mxu0 0.0
        %1117 = vmatpush.msra.mxu0 0.0
        %1118 = vmatpush.msra.mxu0 0.0
        %1119 = vmatpush.msra.mxu0 0.0
        %1120 = vmatpush.msra.mxu0 0.0
        %1121 = vmatpush.msra.mxu0 0.0
        %1122 = vmatpush.msra.mxu0 0.0
        %1123 = vmatpush.msra.mxu0 0.0
        %1124 = vmatpush.msra.mxu0 0.0
        %1125 = vmatpush.msra.mxu0 0.0
        %1126 = vmatpush.msra.mxu0 0.0
        %1127 = vmatpush.msra.mxu0 0.0
        %1128 = vmatpush.msra.mxu0 0.0
        %1129 = vmatpush.msra.mxu0 %v1020
        %1130 = vmatpush.msra.mxu0 %v1017
        %1131 = vmatmul.f32.gmra.mxu0 %v785
        %v1132 = vpop.f32.mrf.mxu0
        %v1133 = vadd.f32 0.0, %v1132
        %1134 = vmatmul.f32.gmra.mxu0 %v788
        %v1135 = vpop.f32.mrf.mxu0
        %v1136 = vadd.f32 0.0, %v1135
        %1137 = vdwg.mxu0
        %1138 = vmatpush.msra.mxu0 0.0
        %1139 = vmatpush.msra.mxu0 0.0
        %1140 = vmatpush.msra.mxu0 0.0
        %1141 = vmatpush.msra.mxu0 0.0
        %1142 = vmatpush.msra.mxu0 0.0
        %1143 = vmatpush.msra.mxu0 0.0
        %1144 = vmatpush.msra.mxu0 0.0
        %1145 = vmatpush.msra.mxu0 0.0
        %1146 = vmatpush.msra.mxu0 0.0
        %1147 = vmatpush.msra.mxu0 0.0
        %1148 = vmatpush.msra.mxu0 0.0
        %1149 = vmatpush.msra.mxu0 0.0
        %1150 = vmatpush.msra.mxu0 0.0
        %1151 = vmatpush.msra.mxu0 0.0
        %1152 = vmatpush.msra.mxu0 %v1026
        %1153 = vmatpush.msra.mxu0 %v1023
        %1154 = vmatmul.f32.gmra.mxu0 %v814
        %v1155 = vpop.f32.mrf.mxu0
        %v1156 = vadd.f32 0.0, %v1155
        %1157 = vmatmul.f32.gmra.mxu0 %v817
        %v1158 = vpop.f32.mrf.mxu0
        %v1159 = vadd.f32 0.0, %v1158
        %1160 = vdwg.mxu0
        %1161 = vmatpush.msra.mxu0 0.0
        %1162 = vmatpush.msra.mxu0 0.0
        %1163 = vmatpush.msra.mxu0 0.0
        %1164 = vmatpush.msra.mxu0 0.0
        %1165 = vmatpush.msra.mxu0 0.0
        %1166 = vmatpush.msra.mxu0 0.0
        %1167 = vmatpush.msra.mxu0 0.0
        %1168 = vmatpush.msra.mxu0 0.0
        %1169 = vmatpush.msra.mxu0 0.0
        %1170 = vmatpush.msra.mxu0 0.0
        %1171 = vmatpush.msra.mxu0 0.0
        %1172 = vmatpush.msra.mxu0 0.0
        %1173 = vmatpush.msra.mxu0 0.0
        %1174 = vmatpush.msra.mxu0 0.0
        %1175 = vmatpush.msra.mxu0 %v1032
        %1176 = vmatpush.msra.mxu0 %v1029
        %1177 = vmatmul.f32.gmra.mxu0 %v843
        %v1178 = vpop.f32.mrf.mxu0
        %v1179 = vadd.f32 0.0, %v1178
        %1180 = vmatmul.f32.gmra.mxu0 %v846
        %v1181 = vpop.f32.mrf.mxu0
        %v1182 = vadd.f32 0.0, %v1181
        %1183 = vdwg.mxu0
        %1184 = vmatpush.msra.mxu0 0.0
        %1185 = vmatpush.msra.mxu0 0.0
        %1186 = vmatpush.msra.mxu0 0.0
        %1187 = vmatpush.msra.mxu0 0.0
        %1188 = vmatpush.msra.mxu0 0.0
        %1189 = vmatpush.msra.mxu0 0.0
        %1190 = vmatpush.msra.mxu0 0.0
        %1191 = vmatpush.msra.mxu0 0.0
        %1192 = vmatpush.msra.mxu0 0.0
        %1193 = vmatpush.msra.mxu0 0.0
        %1194 = vmatpush.msra.mxu0 0.0
        %1195 = vmatpush.msra.mxu0 0.0
        %1196 = vmatpush.msra.mxu0 0.0
        %1197 = vmatpush.msra.mxu0 0.0
        %1198 = vmatpush.msra.mxu0 %v1038
        %1199 = vmatpush.msra.mxu0 %v1035
        %1200 = vmatmul.f32.gmra.mxu0 %v872
        %v1201 = vpop.f32.mrf.mxu0
        %v1202 = vadd.f32 0.0, %v1201
        %1203 = vmatmul.f32.gmra.mxu0 %v875
        %v1204 = vpop.f32.mrf.mxu0
        %v1205 = vadd.f32 0.0, %v1204
        %1206 = vdwg.mxu0
        %1207 = vmatpush.msra.mxu0 0.0
        %1208 = vmatpush.msra.mxu0 0.0
        %1209 = vmatpush.msra.mxu0 0.0
        %1210 = vmatpush.msra.mxu0 0.0
        %1211 = vmatpush.msra.mxu0 0.0
        %1212 = vmatpush.msra.mxu0 0.0
        %1213 = vmatpush.msra.mxu0 0.0
        %1214 = vmatpush.msra.mxu0 0.0
        %1215 = vmatpush.msra.mxu0 0.0
        %1216 = vmatpush.msra.mxu0 0.0
        %1217 = vmatpush.msra.mxu0 0.0
        %1218 = vmatpush.msra.mxu0 0.0
        %1219 = vmatpush.msra.mxu0 0.0
        %1220 = vmatpush.msra.mxu0 0.0
        %1221 = vmatpush.msra.mxu0 %v1044
        %1222 = vmatpush.msra.mxu0 %v1041
        %1223 = vmatmul.f32.gmra.mxu0 %v901
        %v1224 = vpop.f32.mrf.mxu0
        %v1225 = vadd.f32 0.0, %v1224
        %1226 = vmatmul.f32.gmra.mxu0 %v904
        %v1227 = vpop.f32.mrf.mxu0
        %v1228 = vadd.f32 0.0, %v1227
        %1229 = vdwg.mxu0
        %v1230 = vld [vmem:[%s5] sm:$0x1]
        %v1232 = vperm.slane %v1230, 0
        %v1234 = vadd.f32 %v1064, %v1232
        %v1235 = vadd.f32 %v1067, %v1232
        %v1236 = vadd.f32 %v1087, %v1232
        %v1237 = vadd.f32 %v1090, %v1232
        %v1238 = vadd.f32 %v1110, %v1232
        %v1239 = vadd.f32 %v1113, %v1232
        %v1240 = vadd.f32 %v1133, %v1232
        %v1241 = vadd.f32 %v1136, %v1232
        %v1242 = vadd.f32 %v1156, %v1232
        %v1243 = vadd.f32 %v1159, %v1232
        %v1244 = vadd.f32 %v1179, %v1232
        %v1245 = vadd.f32 %v1182, %v1232
        %v1246 = vadd.f32 %v1202, %v1232
        %v1247 = vadd.f32 %v1205, %v1232
        %v1248 = vadd.f32 %v1225, %v1232
        %v1249 = vadd.f32 %v1228, %v1232
        %v1250 = vmax.f32 %v1234, 0.0
        %v1251 = vmax.f32 %v1235, 0.0
        %v1252 = vmax.f32 %v1236, 0.0
        %v1253 = vmax.f32 %v1237, 0.0
        %v1254 = vmax.f32 %v1238, 0.0
        %v1255 = vmax.f32 %v1239, 0.0
        %v1256 = vmax.f32 %v1240, 0.0
        %v1257 = vmax.f32 %v1241, 0.0
        %v1258 = vmax.f32 %v1242, 0.0
        %v1259 = vmax.f32 %v1243, 0.0
        %v1260 = vmax.f32 %v1244, 0.0
        %v1261 = vmax.f32 %v1245, 0.0
        %v1262 = vmax.f32 %v1246, 0.0
        %v1263 = vmax.f32 %v1247, 0.0
        %v1264 = vmax.f32 %v1248, 0.0
        %v1265 = vmax.f32 %v1249, 0.0
        %v1266 = vld [vmem:[#allocation5] sm:$0xff]
        %v1267 = vld [vmem:[#allocation5 + $0x8] sm:$0xff]
        %v1268 = vld [vmem:[#allocation5 + $0x10] sm:$0xff]
        %v1269 = vld [vmem:[#allocation5 + $0x18] sm:$0xff]
        %v1270 = vld [vmem:[#allocation5 + $0x20] sm:$0xff]
        %v1271 = vld [vmem:[#allocation5 + $0x28] sm:$0xff]
        %v1272 = vld [vmem:[#allocation5 + $0x30] sm:$0xff]
        %v1273 = vld [vmem:[#allocation5 + $0x38] sm:$0xff]
        %v1274 = vld [vmem:[#allocation5 + $0x40] sm:$0xff]
        %v1275 = vld [vmem:[#allocation5 + $0x48] sm:$0xff]
        %v1276 = vld [vmem:[#allocation5 + $0x50] sm:$0xff]
        %v1277 = vld [vmem:[#allocation5 + $0x58] sm:$0xff]
        %v1278 = vld [vmem:[#allocation5 + $0x60] sm:$0xff]
        %v1279 = vld [vmem:[#allocation5 + $0x68] sm:$0xff]
        %v1280 = vld [vmem:[#allocation5 + $0x70] sm:$0xff]
        %v1281 = vld [vmem:[#allocation5 + $0x78] sm:$0xff]
        %1282 = vmatpush.msra.mxu0 %v1281
        %1283 = vmatpush.msra.mxu0 %v1280
        %1284 = vmatpush.msra.mxu0 %v1279
        %1285 = vmatpush.msra.mxu0 %v1278
        %1286 = vmatpush.msra.mxu0 %v1277
        %1287 = vmatpush.msra.mxu0 %v1276
        %1288 = vmatpush.msra.mxu0 %v1275
        %1289 = vmatpush.msra.mxu0 %v1274
        %1290 = vmatpush.msra.mxu0 %v1273
        %1291 = vmatpush.msra.mxu0 %v1272
        %1292 = vmatpush.msra.mxu0 %v1271
        %1293 = vmatpush.msra.mxu0 %v1270
        %1294 = vmatpush.msra.mxu0 %v1269
        %1295 = vmatpush.msra.mxu0 %v1268
        %1296 = vmatpush.msra.mxu0 %v1267
        %1297 = vmatpush.msra.mxu0 %v1266
        %1298 = vmatmul.f32.gmra.mxu0 %v1250
        %v1299 = vpop.f32.mrf.mxu0
        %v1300 = vadd.f32 0.0, %v1299
        %1301 = vmatmul.f32.gmra.mxu0 %v1251
        %v1302 = vpop.f32.mrf.mxu0
        %v1303 = vadd.f32 0.0, %v1302
        %1304 = vmatmul.f32.gmra.mxu0 %v1252
        %v1305 = vpop.f32.mrf.mxu0
        %v1306 = vadd.f32 0.0, %v1305
        %1307 = vmatmul.f32.gmra.mxu0 %v1253
        %v1308 = vpop.f32.mrf.mxu0
        %v1309 = vadd.f32 0.0, %v1308
        %1310 = vmatmul.f32.gmra.mxu0 %v1254
        %v1311 = vpop.f32.mrf.mxu0
        %v1312 = vadd.f32 0.0, %v1311
        %1313 = vmatmul.f32.gmra.mxu0 %v1255
        %v1314 = vpop.f32.mrf.mxu0
        %v1315 = vadd.f32 0.0, %v1314
        %1316 = vmatmul.f32.gmra.mxu0 %v1256
        %v1317 = vpop.f32.mrf.mxu0
        %v1318 = vadd.f32 0.0, %v1317
        %1319 = vmatmul.f32.gmra.mxu0 %v1257
        %v1320 = vpop.f32.mrf.mxu0
        %v1321 = vadd.f32 0.0, %v1320
        %1322 = vmatmul.f32.gmra.mxu0 %v1258
        %v1323 = vpop.f32.mrf.mxu0
        %v1324 = vadd.f32 0.0, %v1323
        %1325 = vmatmul.f32.gmra.mxu0 %v1259
        %v1326 = vpop.f32.mrf.mxu0
        %v1327 = vadd.f32 0.0, %v1326
        %1328 = vmatmul.f32.gmra.mxu0 %v1260
        %v1329 = vpop.f32.mrf.mxu0
        %v1330 = vadd.f32 0.0, %v1329
        %1331 = vmatmul.f32.gmra.mxu0 %v1261
        %v1332 = vpop.f32.mrf.mxu0
        %v1333 = vadd.f32 0.0, %v1332
        %1334 = vmatmul.f32.gmra.mxu0 %v1262
        %v1335 = vpop.f32.mrf.mxu0
        %v1336 = vadd.f32 0.0, %v1335
        %1337 = vmatmul.f32.gmra.mxu0 %v1263
        %v1338 = vpop.f32.mrf.mxu0
        %v1339 = vadd.f32 0.0, %v1338
        %1340 = vmatmul.f32.gmra.mxu0 %v1264
        %v1341 = vpop.f32.mrf.mxu0
        %v1342 = vadd.f32 0.0, %v1341
        %1343 = vmatmul.f32.gmra.mxu0 %v1265
        %v1344 = vpop.f32.mrf.mxu0
        %v1345 = vadd.f32 0.0, %v1344
        %1346 = vdwg.mxu0
        %1347 = vmatpush.msra.mxu0 0.0
        %1348 = vmatpush.msra.mxu0 0.0
        %1349 = vmatpush.msra.mxu0 0.0
        %1350 = vmatpush.msra.mxu0 0.0
        %1351 = vmatpush.msra.mxu0 0.0
        %1352 = vmatpush.msra.mxu0 0.0
        %1353 = vmatpush.msra.mxu0 0.0
        %1354 = vmatpush.msra.mxu0 0.0
        %1355 = vmatpush.msra.mxu0 0.0
        %1356 = vmatpush.msra.mxu0 0.0
        %1357 = vmatpush.msra.mxu0 0.0
        %1358 = vmatpush.msra.mxu0 0.0
        %1359 = vmatpush.msra.mxu0 0.0
        %1360 = vmatpush.msra.mxu0 0.0
        %1361 = vmatpush.msra.mxu0 %v1303
        %1362 = vmatpush.msra.mxu0 %v1300
        %1363 = vmatmul.f32.gmra.mxu0 %v698
        %v1364 = vpop.f32.mrf.mxu0
        %v1365 = vadd.f32 0.0, %v1364
        %1366 = vmatmul.f32.gmra.mxu0 %v701
        %v1367 = vpop.f32.mrf.mxu0
        %v1368 = vadd.f32 0.0, %v1367
        %1369 = vdwg.mxu0
        %1370 = vmatpush.msra.mxu0 0.0
        %1371 = vmatpush.msra.mxu0 0.0
        %1372 = vmatpush.msra.mxu0 0.0
        %1373 = vmatpush.msra.mxu0 0.0
        %1374 = vmatpush.msra.mxu0 0.0
        %1375 = vmatpush.msra.mxu0 0.0
        %1376 = vmatpush.msra.mxu0 0.0
        %1377 = vmatpush.msra.mxu0 0.0
        %1378 = vmatpush.msra.mxu0 0.0
        %1379 = vmatpush.msra.mxu0 0.0
        %1380 = vmatpush.msra.mxu0 0.0
        %1381 = vmatpush.msra.mxu0 0.0
        %1382 = vmatpush.msra.mxu0 0.0
        %1383 = vmatpush.msra.mxu0 0.0
        %1384 = vmatpush.msra.mxu0 %v1309
        %1385 = vmatpush.msra.mxu0 %v1306
        %1386 = vmatmul.f32.gmra.mxu0 %v727
        %v1387 = vpop.f32.mrf.mxu0
        %v1388 = vadd.f32 0.0, %v1387
        %1389 = vmatmul.f32.gmra.mxu0 %v730
        %v1390 = vpop.f32.mrf.mxu0
        %v1391 = vadd.f32 0.0, %v1390
        %1392 = vdwg.mxu0
        %1393 = vmatpush.msra.mxu0 0.0
        %1394 = vmatpush.msra.mxu0 0.0
        %1395 = vmatpush.msra.mxu0 0.0
        %1396 = vmatpush.msra.mxu0 0.0
        %1397 = vmatpush.msra.mxu0 0.0
        %1398 = vmatpush.msra.mxu0 0.0
        %1399 = vmatpush.msra.mxu0 0.0
        %1400 = vmatpush.msra.mxu0 0.0
        %1401 = vmatpush.msra.mxu0 0.0
        %1402 = vmatpush.msra.mxu0 0.0
        %1403 = vmatpush.msra.mxu0 0.0
        %1404 = vmatpush.msra.mxu0 0.0
        %1405 = vmatpush.msra.mxu0 0.0
        %1406 = vmatpush.msra.mxu0 0.0
        %1407 = vmatpush.msra.mxu0 %v1315
        %1408 = vmatpush.msra.mxu0 %v1312
        %1409 = vmatmul.f32.gmra.mxu0 %v756
        %v1410 = vpop.f32.mrf.mxu0
        %v1411 = vadd.f32 0.0, %v1410
        %1412 = vmatmul.f32.gmra.mxu0 %v759
        %v1413 = vpop.f32.mrf.mxu0
        %v1414 = vadd.f32 0.0, %v1413
        %1415 = vdwg.mxu0
        %1416 = vmatpush.msra.mxu0 0.0
        %1417 = vmatpush.msra.mxu0 0.0
        %1418 = vmatpush.msra.mxu0 0.0
        %1419 = vmatpush.msra.mxu0 0.0
        %1420 = vmatpush.msra.mxu0 0.0
        %1421 = vmatpush.msra.mxu0 0.0
        %1422 = vmatpush.msra.mxu0 0.0
        %1423 = vmatpush.msra.mxu0 0.0
        %1424 = vmatpush.msra.mxu0 0.0
        %1425 = vmatpush.msra.mxu0 0.0
        %1426 = vmatpush.msra.mxu0 0.0
        %1427 = vmatpush.msra.mxu0 0.0
        %1428 = vmatpush.msra.mxu0 0.0
        %1429 = vmatpush.msra.mxu0 0.0
        %1430 = vmatpush.msra.mxu0 %v1321
        %1431 = vmatpush.msra.mxu0 %v1318
        %1432 = vmatmul.f32.gmra.mxu0 %v785
        %v1433 = vpop.f32.mrf.mxu0
        %v1434 = vadd.f32 0.0, %v1433
        %1435 = vmatmul.f32.gmra.mxu0 %v788
        %v1436 = vpop.f32.mrf.mxu0
        %v1437 = vadd.f32 0.0, %v1436
        %1438 = vdwg.mxu0
        %1439 = vmatpush.msra.mxu0 0.0
        %1440 = vmatpush.msra.mxu0 0.0
        %1441 = vmatpush.msra.mxu0 0.0
        %1442 = vmatpush.msra.mxu0 0.0
        %1443 = vmatpush.msra.mxu0 0.0
        %1444 = vmatpush.msra.mxu0 0.0
        %1445 = vmatpush.msra.mxu0 0.0
        %1446 = vmatpush.msra.mxu0 0.0
        %1447 = vmatpush.msra.mxu0 0.0
        %1448 = vmatpush.msra.mxu0 0.0
        %1449 = vmatpush.msra.mxu0 0.0
        %1450 = vmatpush.msra.mxu0 0.0
        %1451 = vmatpush.msra.mxu0 0.0
        %1452 = vmatpush.msra.mxu0 0.0
        %1453 = vmatpush.msra.mxu0 %v1327
        %1454 = vmatpush.msra.mxu0 %v1324
        %1455 = vmatmul.f32.gmra.mxu0 %v814
        %v1456 = vpop.f32.mrf.mxu0
        %v1457 = vadd.f32 0.0, %v1456
        %1458 = vmatmul.f32.gmra.mxu0 %v817
        %v1459 = vpop.f32.mrf.mxu0
        %v1460 = vadd.f32 0.0, %v1459
        %1461 = vdwg.mxu0
        %1462 = vmatpush.msra.mxu0 0.0
        %1463 = vmatpush.msra.mxu0 0.0
        %1464 = vmatpush.msra.mxu0 0.0
        %1465 = vmatpush.msra.mxu0 0.0
        %1466 = vmatpush.msra.mxu0 0.0
        %1467 = vmatpush.msra.mxu0 0.0
        %1468 = vmatpush.msra.mxu0 0.0
        %1469 = vmatpush.msra.mxu0 0.0
        %1470 = vmatpush.msra.mxu0 0.0
        %1471 = vmatpush.msra.mxu0 0.0
        %1472 = vmatpush.msra.mxu0 0.0
        %1473 = vmatpush.msra.mxu0 0.0
        %1474 = vmatpush.msra.mxu0 0.0
        %1475 = vmatpush.msra.mxu0 0.0
        %1476 = vmatpush.msra.mxu0 %v1333
        %1477 = vmatpush.msra.mxu0 %v1330
        %1478 = vmatmul.f32.gmra.mxu0 %v843
        %v1479 = vpop.f32.mrf.mxu0
        %v1480 = vadd.f32 0.0, %v1479
        %1481 = vmatmul.f32.gmra.mxu0 %v846
        %v1482 = vpop.f32.mrf.mxu0
        %v1483 = vadd.f32 0.0, %v1482
        %1484 = vdwg.mxu0
        %1485 = vmatpush.msra.mxu0 0.0
        %1486 = vmatpush.msra.mxu0 0.0
        %1487 = vmatpush.msra.mxu0 0.0
        %1488 = vmatpush.msra.mxu0 0.0
        %1489 = vmatpush.msra.mxu0 0.0
        %1490 = vmatpush.msra.mxu0 0.0
        %1491 = vmatpush.msra.mxu0 0.0
        %1492 = vmatpush.msra.mxu0 0.0
        %1493 = vmatpush.msra.mxu0 0.0
        %1494 = vmatpush.msra.mxu0 0.0
        %1495 = vmatpush.msra.mxu0 0.0
        %1496 = vmatpush.msra.mxu0 0.0
        %1497 = vmatpush.msra.mxu0 0.0
        %1498 = vmatpush.msra.mxu0 0.0
        %1499 = vmatpush.msra.mxu0 %v1339
        %1500 = vmatpush.msra.mxu0 %v1336
        %1501 = vmatmul.f32.gmra.mxu0 %v872
        %v1502 = vpop.f32.mrf.mxu0
        %v1503 = vadd.f32 0.0, %v1502
        %1504 = vmatmul.f32.gmra.mxu0 %v875
        %v1505 = vpop.f32.mrf.mxu0
        %v1506 = vadd.f32 0.0, %v1505
        %1507 = vdwg.mxu0
        %1508 = vmatpush.msra.mxu0 0.0
        %1509 = vmatpush.msra.mxu0 0.0
        %1510 = vmatpush.msra.mxu0 0.0
        %1511 = vmatpush.msra.mxu0 0.0
        %1512 = vmatpush.msra.mxu0 0.0
        %1513 = vmatpush.msra.mxu0 0.0
        %1514 = vmatpush.msra.mxu0 0.0
        %1515 = vmatpush.msra.mxu0 0.0
        %1516 = vmatpush.msra.mxu0 0.0
        %1517 = vmatpush.msra.mxu0 0.0
        %1518 = vmatpush.msra.mxu0 0.0
        %1519 = vmatpush.msra.mxu0 0.0
        %1520 = vmatpush.msra.mxu0 0.0
        %1521 = vmatpush.msra.mxu0 0.0
        %1522 = vmatpush.msra.mxu0 %v1345
        %1523 = vmatpush.msra.mxu0 %v1342
        %1524 = vmatmul.f32.gmra.mxu0 %v901
        %v1525 = vpop.f32.mrf.mxu0
        %v1526 = vadd.f32 0.0, %v1525
        %1527 = vmatmul.f32.gmra.mxu0 %v904
        %v1528 = vpop.f32.mrf.mxu0
        %v1529 = vadd.f32 0.0, %v1528
        %1530 = vdwg.mxu0
        %v1531 = vld [vmem:[%s7] sm:$0x1]
        %v1533 = vperm.slane %v1531, 0
        %v1535 = vadd.f32 %v1365, %v1533
        %v1536 = vadd.f32 %v1368, %v1533
        %v1537 = vadd.f32 %v1388, %v1533
        %v1538 = vadd.f32 %v1391, %v1533
        %v1539 = vadd.f32 %v1411, %v1533
        %v1540 = vadd.f32 %v1414, %v1533
        %v1541 = vadd.f32 %v1434, %v1533
        %v1542 = vadd.f32 %v1437, %v1533
        %v1543 = vadd.f32 %v1457, %v1533
        %v1544 = vadd.f32 %v1460, %v1533
        %v1545 = vadd.f32 %v1480, %v1533
        %v1546 = vadd.f32 %v1483, %v1533
        %v1547 = vadd.f32 %v1503, %v1533
        %v1548 = vadd.f32 %v1506, %v1533
        %v1549 = vadd.f32 %v1526, %v1533
        %v1550 = vadd.f32 %v1529, %v1533
        %v1551 = vadd.f32 %v1535, %v1536
        %v1552 = vrot.slane %v1551, 4
        %v1553 = vadd.f32 %v1551, %v1552
        %v1554 = vrot.slane %v1553, 2
        %v1555 = vadd.f32 %v1553, %v1554
        %v1556 = vrot.slane %v1555, 1
        %v1557 = vadd.f32 %v1555, %v1556
        %v1558 = vadd.f32 %v1537, %v1538
        %v1559 = vrot.slane %v1558, 4
        %v1560 = vadd.f32 %v1558, %v1559
        %v1561 = vrot.slane %v1560, 2
        %v1562 = vadd.f32 %v1560, %v1561
        %v1563 = vrot.slane %v1562, 1
        %v1564 = vadd.f32 %v1562, %v1563
        %v1565 = vadd.f32 %v1539, %v1540
        %v1566 = vrot.slane %v1565, 4
        %v1567 = vadd.f32 %v1565, %v1566
        %v1568 = vrot.slane %v1567, 2
        %v1569 = vadd.f32 %v1567, %v1568
        %v1570 = vrot.slane %v1569, 1
        %v1571 = vadd.f32 %v1569, %v1570
        %v1572 = vadd.f32 %v1541, %v1542
        %v1573 = vrot.slane %v1572, 4
        %v1574 = vadd.f32 %v1572, %v1573
        %v1575 = vrot.slane %v1574, 2
        %v1576 = vadd.f32 %v1574, %v1575
        %v1577 = vrot.slane %v1576, 1
        %v1578 = vadd.f32 %v1576, %v1577
        %v1579 = vadd.f32 %v1543, %v1544
        %v1580 = vrot.slane %v1579, 4
        %v1581 = vadd.f32 %v1579, %v1580
        %v1582 = vrot.slane %v1581, 2
        %v1583 = vadd.f32 %v1581, %v1582
        %v1584 = vrot.slane %v1583, 1
        %v1585 = vadd.f32 %v1583, %v1584
        %v1586 = vadd.f32 %v1545, %v1546
        %v1587 = vrot.slane %v1586, 4
        %v1588 = vadd.f32 %v1586, %v1587
        %v1589 = vrot.slane %v1588, 2
        %v1590 = vadd.f32 %v1588, %v1589
        %v1591 = vrot.slane %v1590, 1
        %v1592 = vadd.f32 %v1590, %v1591
        %v1593 = vadd.f32 %v1547, %v1548
        %v1594 = vrot.slane %v1593, 4
        %v1595 = vadd.f32 %v1593, %v1594
        %v1596 = vrot.slane %v1595, 2
        %v1597 = vadd.f32 %v1595, %v1596
        %v1598 = vrot.slane %v1597, 1
        %v1599 = vadd.f32 %v1597, %v1598
        %v1600 = vadd.f32 %v1549, %v1550
        %v1601 = vrot.slane %v1600, 4
        %v1602 = vadd.f32 %v1600, %v1601
        %v1603 = vrot.slane %v1602, 2
        %v1604 = vadd.f32 %v1602, %v1603
        %v1605 = vrot.slane %v1604, 1
        %v1606 = vadd.f32 %v1604, %v1605
        %v1607 = vmul.f32 %v1557, 0.0625
        %v1608 = vmul.f32 %v1564, 0.0625
        %v1609 = vmul.f32 %v1571, 0.0625
        %v1610 = vmul.f32 %v1578, 0.0625
        %v1611 = vmul.f32 %v1585, 0.0625
        %v1612 = vmul.f32 %v1592, 0.0625
        %v1613 = vmul.f32 %v1599, 0.0625
        %v1614 = vmul.f32 %v1606, 0.0625
        %v1615 = vmax.f32 %v1535, %v1536
        %v1616 = vrot.slane %v1615, 4
        %v1617 = vmax.f32 %v1615, %v1616
        %v1618 = vrot.slane %v1617, 2
        %v1619 = vmax.f32 %v1617, %v1618
        %v1620 = vrot.slane %v1619, 1
        %v1621 = vmax.f32 %v1619, %v1620
        %v1622 = vmax.f32 %v1537, %v1538
        %v1623 = vrot.slane %v1622, 4
        %v1624 = vmax.f32 %v1622, %v1623
        %v1625 = vrot.slane %v1624, 2
        %v1626 = vmax.f32 %v1624, %v1625
        %v1627 = vrot.slane %v1626, 1
        %v1628 = vmax.f32 %v1626, %v1627
        %v1629 = vmax.f32 %v1539, %v1540
        %v1630 = vrot.slane %v1629, 4
        %v1631 = vmax.f32 %v1629, %v1630
        %v1632 = vrot.slane %v1631, 2
        %v1633 = vmax.f32 %v1631, %v1632
        %v1634 = vrot.slane %v1633, 1
        %v1635 = vmax.f32 %v1633, %v1634
        %v1636 = vmax.f32 %v1541, %v1542
        %v1637 = vrot.slane %v1636, 4
        %v1638 = vmax.f32 %v1636, %v1637
        %v1639 = vrot.slane %v1638, 2
        %v1640 = vmax.f32 %v1638, %v1639
        %v1641 = vrot.slane %v1640, 1
        %v1642 = vmax.f32 %v1640, %v1641
        %v1643 = vmax.f32 %v1543, %v1544
        %v1644 = vrot.slane %v1643, 4
        %v1645 = vmax.f32 %v1643, %v1644
        %v1646 = vrot.slane %v1645, 2
        %v1647 = vmax.f32 %v1645, %v1646
        %v1648 = vrot.slane %v1647, 1
        %v1649 = vmax.f32 %v1647, %v1648
        %v1650 = vmax.f32 %v1545, %v1546
        %v1651 = vrot.slane %v1650, 4
        %v1652 = vmax.f32 %v1650, %v1651
        %v1653 = vrot.slane %v1652, 2
        %v1654 = vmax.f32 %v1652, %v1653
        %v1655 = vrot.slane %v1654, 1
        %v1656 = vmax.f32 %v1654, %v1655
        %v1657 = vmax.f32 %v1547, %v1548
        %v1658 = vrot.slane %v1657, 4
        %v1659 = vmax.f32 %v1657, %v1658
        %v1660 = vrot.slane %v1659, 2
        %v1661 = vmax.f32 %v1659, %v1660
        %v1662 = vrot.slane %v1661, 1
        %v1663 = vmax.f32 %v1661, %v1662
        %v1664 = vmax.f32 %v1549, %v1550
        %v1665 = vrot.slane %v1664, 4
        %v1666 = vmax.f32 %v1664, %v1665
        %v1667 = vrot.slane %v1666, 2
        %v1668 = vmax.f32 %v1666, %v1667
        %v1669 = vrot.slane %v1668, 1
        %v1670 = vmax.f32 %v1668, %v1669
        %v1671 = vld [vmem:[#allocation7] sm:$0xff]
        %v1672 = vld [vmem:[#allocation7 + $0x8] sm:$0xff]
        %v1673 = vld [vmem:[#allocation7 + $0x10] sm:$0xff]
        %v1674 = vld [vmem:[#allocation7 + $0x18] sm:$0xff]
        %v1675 = vld [vmem:[#allocation7 + $0x20] sm:$0xff]
        %v1676 = vld [vmem:[#allocation7 + $0x28] sm:$0xff]
        %v1677 = vld [vmem:[#allocation7 + $0x30] sm:$0xff]
        %v1678 = vld [vmem:[#allocation7 + $0x38] sm:$0xff]
        %v1679 = vld [vmem:[#allocation7 + $0x40] sm:$0xff]
        %v1680 = vld [vmem:[#allocation7 + $0x48] sm:$0xff]
        %v1681 = vld [vmem:[#allocation7 + $0x50] sm:$0xff]
        %v1682 = vld [vmem:[#allocation7 + $0x58] sm:$0xff]
        %v1683 = vld [vmem:[#allocation7 + $0x60] sm:$0xff]
        %v1684 = vld [vmem:[#allocation7 + $0x68] sm:$0xff]
        %v1685 = vld [vmem:[#allocation7 + $0x70] sm:$0xff]
        %v1686 = vld [vmem:[#allocation7 + $0x78] sm:$0xff]
        %v1687 = vld [vmem:[#allocation8] sm:$0xff]
        %v1688 = vld [vmem:[#allocation8 + $0x8] sm:$0xff]
        %v1689 = vld [vmem:[#allocation8 + $0x10] sm:$0xff]
        %v1690 = vld [vmem:[#allocation8 + $0x18] sm:$0xff]
        %v1691 = vld [vmem:[#allocation8 + $0x20] sm:$0xff]
        %v1692 = vld [vmem:[#allocation8 + $0x28] sm:$0xff]
        %v1693 = vld [vmem:[#allocation8 + $0x30] sm:$0xff]
        %v1694 = vld [vmem:[#allocation8 + $0x38] sm:$0xff]
        %v1695 = vld [vmem:[#allocation8 + $0x40] sm:$0xff]
        %v1696 = vld [vmem:[#allocation8 + $0x48] sm:$0xff]
        %v1697 = vld [vmem:[#allocation8 + $0x50] sm:$0xff]
        %v1698 = vld [vmem:[#allocation8 + $0x58] sm:$0xff]
        %v1699 = vld [vmem:[#allocation8 + $0x60] sm:$0xff]
        %v1700 = vld [vmem:[#allocation8 + $0x68] sm:$0xff]
        %v1701 = vld [vmem:[#allocation8 + $0x70] sm:$0xff]
        %v1702 = vld [vmem:[#allocation8 + $0x78] sm:$0xff]
        %vm1711 = vcmask 1041409
        %v1712 = vsel %vm1711, %v1628, %v1621
        %vm1713 = vcmask 1042434
        %v1714 = vsel %vm1713, %v1635, %v1712
        %vm1715 = vcmask 1043459
        %v1716 = vsel %vm1715, %v1642, %v1714
        %vm1717 = vcmask 1044484
        %v1718 = vsel %vm1717, %v1649, %v1716
        %vm1719 = vcmask 1045509
        %v1720 = vsel %vm1719, %v1656, %v1718
        %vm1721 = vcmask 1046534
        %v1722 = vsel %vm1721, %v1663, %v1720
        %vm1723 = vcmask 1047559
        %v1724 = vsel %vm1723, %v1670, %v1722
        %1726 = vmatpush.msra.mxu0 %v1702
        %1727 = vmatpush.msra.mxu0 %v1701
        %1728 = vmatpush.msra.mxu0 %v1700
        %1729 = vmatpush.msra.mxu0 %v1699
        %1730 = vmatpush.msra.mxu0 %v1698
        %1731 = vmatpush.msra.mxu0 %v1697
        %1732 = vmatpush.msra.mxu0 %v1696
        %1733 = vmatpush.msra.mxu0 %v1695
        %1734 = vmatpush.msra.mxu0 %v1694
        %1735 = vmatpush.msra.mxu0 %v1693
        %1736 = vmatpush.msra.mxu0 %v1692
        %1737 = vmatpush.msra.mxu0 %v1691
        %1738 = vmatpush.msra.mxu0 %v1690
        %1739 = vmatpush.msra.mxu0 %v1689
        %1740 = vmatpush.msra.mxu0 %v1688
        %1741 = vmatpush.msra.mxu0 %v1687
        %1742 = vmatmul.f32.gmra.mxu0 %v1724
        %v1743 = vpop.f32.mrf.mxu0
        %v1744 = vadd.f32 0.0, %v1743
        %1745 = vdwg.mxu0
        %v1754 = vsel %vm1711, %v1608, %v1607
        %v1755 = vsel %vm1713, %v1609, %v1754
        %v1756 = vsel %vm1715, %v1610, %v1755
        %v1757 = vsel %vm1717, %v1611, %v1756
        %v1758 = vsel %vm1719, %v1612, %v1757
        %v1759 = vsel %vm1721, %v1613, %v1758
        %v1760 = vsel %vm1723, %v1614, %v1759
        %1762 = vmatpush.msra.mxu0 %v1686
        %1763 = vmatpush.msra.mxu0 %v1685
        %1764 = vmatpush.msra.mxu0 %v1684
        %1765 = vmatpush.msra.mxu0 %v1683
        %1766 = vmatpush.msra.mxu0 %v1682
        %1767 = vmatpush.msra.mxu0 %v1681
        %1768 = vmatpush.msra.mxu0 %v1680
        %1769 = vmatpush.msra.mxu0 %v1679
        %1770 = vmatpush.msra.mxu0 %v1678
        %1771 = vmatpush.msra.mxu0 %v1677
        %1772 = vmatpush.msra.mxu0 %v1676
        %1773 = vmatpush.msra.mxu0 %v1675
        %1774 = vmatpush.msra.mxu0 %v1674
        %1775 = vmatpush.msra.mxu0 %v1673
        %1776 = vmatpush.msra.mxu0 %v1672
        %1777 = vmatpush.msra.mxu0 %v1671
        %1778 = vmatmul.f32.gmra.mxu0 %v1760
        %v1779 = vpop.f32.mrf.mxu0
        %v1780 = vadd.f32 %v1744, %v1779
        %1781 = vdwg.mxu0
        %v1782 = vld [vmem:[%s10] sm:$0x1]
        %v1784 = vperm.slane %v1782, 0
        %v1786 = vadd.f32 %v1780, %v1784
        %v1787 = vmax.f32 %v1786, 0.0
        %v1788 = vld [vmem:[#allocation10] sm:$0xff]
        %v1789 = vld [vmem:[#allocation10 + $0x8] sm:$0xff]
        %v1790 = vld [vmem:[#allocation10 + $0x10] sm:$0xff]
        %v1791 = vld [vmem:[#allocation10 + $0x18] sm:$0xff]
        %v1792 = vld [vmem:[#allocation10 + $0x20] sm:$0xff]
        %v1793 = vld [vmem:[#allocation10 + $0x28] sm:$0xff]
        %v1794 = vld [vmem:[#allocation10 + $0x30] sm:$0xff]
        %v1795 = vld [vmem:[#allocation10 + $0x38] sm:$0xff]
        %v1796 = vld [vmem:[#allocation10 + $0x40] sm:$0xff]
        %v1797 = vld [vmem:[#allocation10 + $0x48] sm:$0xff]
        %v1798 = vld [vmem:[#allocation10 + $0x50] sm:$0xff]
        %v1799 = vld [vmem:[#allocation10 + $0x58] sm:$0xff]
        %v1800 = vld [vmem:[#allocation10 + $0x60] sm:$0xff]
        %v1801 = vld [vmem:[#allocation10 + $0x68] sm:$0xff]
        %v1802 = vld [vmem:[#allocation10 + $0x70] sm:$0xff]
        %v1803 = vld [vmem:[#allocation10 + $0x78] sm:$0xff]
        %v1804 = vld [vmem:[%s12] sm:$0x1]
        %v1806 = vperm.slane %v1804, 0
        %1808 = vmatpush.msra.mxu0 %v1803
        %1809 = vmatpush.msra.mxu0 %v1802
        %1810 = vmatpush.msra.mxu0 %v1801
        %1811 = vmatpush.msra.mxu0 %v1800
        %1812 = vmatpush.msra.mxu0 %v1799
        %1813 = vmatpush.msra.mxu0 %v1798
        %1814 = vmatpush.msra.mxu0 %v1797
        %1815 = vmatpush.msra.mxu0 %v1796
        %1816 = vmatpush.msra.mxu0 %v1795
        %1817 = vmatpush.msra.mxu0 %v1794
        %1818 = vmatpush.msra.mxu0 %v1793
        %1819 = vmatpush.msra.mxu0 %v1792
        %1820 = vmatpush.msra.mxu0 %v1791
        %1821 = vmatpush.msra.mxu0 %v1790
        %1822 = vmatpush.msra.mxu0 %v1789
        %1823 = vmatpush.msra.mxu0 %v1788
        %1824 = vmatmul.f32.gmra.mxu0 %v1787
        %v1825 = vpop.f32.mrf.mxu0
        %v1826 = vadd.f32 %v1806, %v1825
        %1827 = vdwg.mxu0
        %1828 = vmax.xlane.f32.xlu0 %v1826
        %v1829 = vpop.xlane.xlu0 %1828
        %v1830 = vsub.f32 %v1826, %v1829
        %v1831 = vmul.f32 %v1830, 1.442695
        %v1832 = vpow.pop %v1831
        %1833 = vadd.xlane.f32.xlu0 %v1832
        %v1834 = vpop.xlane.xlu0 %1833
        %v1835 = vlog2.pop %v1834
        %v1836 = vmul.f32 %v1835, 0.6931472
        %v1837 = vsub.f32 %v1830, %v1836
        %1838 = vst [vmem:[%s535] sm:$0xff] %v1837
        %s1839 = sand.u32 %s321, 1
        %s1840 = scalar_lea.sflag [#allocation4], %s1839
        %s1841 = sand.u32 %s321, 1
        %s1842 = smul.addr %s1841, 8
        %s1843 = scalar_lea.vmem [#allocation11], %s1842
        // Predicated region
        $region93: #{mnist_gnn_forward.1} parent=71 // pred_check
          %p1844 = pneg %p331
        $region94: #{mnist_gnn_forward.1} parent=71 // pred_check_branch
          %1846 = sbr.rel (%p1844) target = $region96
        $region95: #{mnist_gnn_forward.1} parent=71 // pred_region
          %1848 = vsyncadd %s1840, 0
          %s1849 = smul.addr %s30, 8
          %s1850 = scalar_lea.hbm %s13, %s1849
          %s1852 = sshll.u32 %s1843, 4
          %s1853 = int_to_ptr.vmem [resolvable:$true] %s1852
          %s1854 = sshll.u32 %s1850, 4
          %s1855 = int_to_ptr.hbm [resolvable:$true] %s1854
          %1857 = dma.vmem_to_hbm [thread:$0]  %s1853, 128, %s1855, %s1840
        $region96: #{mnist_gnn_forward.1} parent=71 // pred_fallthru
          _
      $region72: #{mnist_gnn_forward.1} parent=5 // pred_fallthru
        _
      %p1858 = scmp.le.s32.totalorder 2, %s25
      // Predicated region
      $region97: #{mnist_gnn_forward.1} parent=5 // pred_check
        %p1859 = pneg %p1858
      $region98: #{mnist_gnn_forward.1} parent=5 // pred_check_branch
        %1861 = sbr.rel (%p1859) target = $region100
      $region99: #{mnist_gnn_forward.1} parent=5 // pred_region
        %s1862 = ssub.s32 %s25, 2
        // Predicated region
        $region101: #{mnist_gnn_forward.1} parent=99 // pred_check
          %p1863 = pneg %p337
        $region102: #{mnist_gnn_forward.1} parent=99 // pred_check_branch
          %1865 = sbr.rel (%p1863) target = $region104
        $region103: #{mnist_gnn_forward.1} parent=99 // pred_region
          %s1866 = sand.u32 %s322, 1
          %s1867 = scalar_lea.sflag [#allocation4], %s1866
          %s1868 = sand.u32 %s322, 1
          %s1869 = smul.addr %s1868, 8
          %s1870 = scalar_lea.vmem [#allocation11], %s1869
          %1872 = dma.done %s1867, 128
        $region104: #{mnist_gnn_forward.1} parent=99 // pred_fallthru
          _
      $region100: #{mnist_gnn_forward.1} parent=5 // pred_fallthru
        _
    $region6: #{mnist_gnn_forward.1} parent=1 // loop_footer
      %s29 = sadd.s32 1, %s25
    $region7: #{mnist_gnn_forward.1} parent=1 // loop_footer_branch
      %24 = sbr.rel target = $region3
    $region8: #{mnist_gnn_forward.1} parent=1 // loop_exit
      _
    %1873 = vsyncpa [#allocation3], 1
    %s1874 = scalar_lea.sflag [#allocation3], 1
    %1875 = vsyncpa %s1874, 1
    %1876 = vsyncpa [#allocation6], 1
    %1877 = vsyncpa [#allocation9], 1
    %1878 = vsyncpa [#allocation4], 1
    %s1879 = scalar_lea.sflag [#allocation4], 1
    %1880 = vsyncpa %s1879, 1

</llo_original>
